<compile_context>
chip_gen: v7x
topology: tpu7x:2x2x1
jax: 0.10.0
libtpu: 0.0.40
codegen_flags: <defaults>
</compile_context>

<pallas_src>
import functools
import math

import jax
import jax.numpy as jnp
from jax.experimental import pallas as pl
from jax.experimental.pallas import tpu as pltpu


_VMEM_LIMIT = 32 * 1024 * 1024        # scoped-VMEM limit safe on v5e/v6e/v7x
_TILE_VMEM_BUDGET = 8 * 1024 * 1024   # per-step double-buffered operand budget
_MAX_LANES = 8192                     # lane-tile cap (review: 4096-8192)


# ----------------------------- Pallas kernels -----------------------------

def _level_kernel(x_ref, s_ref, w_ref, o_ref):
    """All four sub-pixel phases of ConvTranspose2d(3, stride=2) + bias +
    leaky_relu(0.01) + (y + skip)/2, fused into one stacked matmul.

      x: (4*Cin+1, bm)     bf16  shifted input windows + ones row (bias)
      s: (4*Cout,  bm)     bf16  parity-major skip
      w: (4*Cout, 4*Cin+1) f32   zero-masked per-phase taps, bias last column
      o: (4*Cout,  bm)     bf16  parity-major merged output
    """
    y = jnp.dot(w_ref[...], x_ref[...].astype(jnp.float32),
                preferred_element_type=jnp.float32)
    y = jnp.where(y >= 0.0, y, 0.01 * y)                      # leaky_relu(0.01)
    o_ref[...] = ((y + s_ref[...].astype(jnp.float32)) * 0.5).astype(o_ref.dtype)


def _out_conv_kernel(x_ref, w_ref, b_ref, o_ref):
    """1x1 conv + numerically stable sigmoid.
      x: (Cin, bm) bf16   w: (nout, Cin) f32   b: (nout, 1) f32   o: (nout, bm) f32
    """
    y = jnp.dot(w_ref[...], x_ref[...].astype(jnp.float32),
                preferred_element_type=jnp.float32) + b_ref[...]
    e = jnp.exp(-jnp.abs(y))                                  # EUP
    s = 1.0 / (1.0 + e)
    o_ref[...] = jnp.where(y >= 0.0, s, 1.0 - s).astype(o_ref.dtype)


# ----------------------------- kernel wrapper -----------------------------

def _round_up(x, m):
    return ((x + m - 1) // m) * m


def _choose_tiles(M, bytes_per_lane):
    """Lane tiling of the flattened batch*spatial axis.

    VMEM-derived tile (double-buffered footprint <= _TILE_VMEM_BUDGET), capped
    at _MAX_LANES, but never larger than half of M (rounded to 128) so the
    grid keeps >= 2 steps whenever possible (v7x has two TensorCores;
    a 1-step grid costs nothing on the single-TC v5e/v6e)."""
    vmem_cap = max(128, (_TILE_VMEM_BUDGET // (2 * max(bytes_per_lane, 1))) // 128 * 128)
    half = _round_up(max((M + 1) // 2, 1), 128)
    bm = max(128, min(_MAX_LANES, vmem_cap, half))
    Mp = _round_up(M, bm)
    return bm, Mp


def _tiled_call(kernel, per_lane, broadcast, out_rows, out_dtype):
    """out(out_rows, M) = kernel(per-lane tiles..., broadcast operands...).

    `per_lane` arrays are (rows, M), tiled along the lane-dense flattened
    batch*spatial axis; `broadcast` arrays are small 2-D operands replicated
    to every grid step."""
    M = per_lane[0].shape[1]
    bytes_per_lane = sum(a.shape[0] * a.dtype.itemsize for a in per_lane)
    bytes_per_lane += out_rows * jnp.dtype(out_dtype).itemsize
    bm, Mp = _choose_tiles(M, bytes_per_lane)

    if Mp > M:
        per_lane = [jnp.pad(a, ((0, 0), (0, Mp - M))) for a in per_lane]
    in_specs = [pl.BlockSpec((a.shape[0], bm), lambda i: (0, i)) for a in per_lane]
    in_specs += [pl.BlockSpec(b.shape, lambda i: (0, 0)) for b in broadcast]

    out = pl.pallas_call(
        kernel,
        out_shape=jax.ShapeDtypeStruct((out_rows, Mp), out_dtype),
        grid=(Mp // bm,),
        in_specs=in_specs,
        out_specs=pl.BlockSpec((out_rows, bm), lambda i: (0, i)),
        compiler_params=pltpu.CompilerParams(
            dimension_semantics=("parallel",),
            vmem_limit_bytes=_VMEM_LIMIT),
    )(*per_lane, *broadcast)
    return out[:, :M] if Mp > M else out


# ----------------------------- decoder level -----------------------------

def _decoder_level(x, skip_nchw, Wt, bt):
    """One decoder level (deconv3x3/s2 + bias + leaky_relu + replicate-pad +
    skip merge), fully fused into a single pallas_call.

    x:         (Cin, N, H, W)   channel-leading activation
    skip_nchw: (N, Cout, Hs, Ws)
    Wt:        (Cin, Cout, 3, 3) torch ConvTranspose2d weight layout
    bt:        (Cout,)
    returns:   (Cout, N, Hs, Ws) bf16 merged activation.
    """
    Cin, N, H, W = x.shape
    Cout = Wt.shape[1]
    Hs, Ws = skip_nchw.shape[2], skip_nchw.shape[3]
    Hy, Wy = 2 * H + 1, 2 * W + 1            # transposed-conv output size
    He, We = H + 1, W + 1                    # per-parity (extended) grid
    M = N * He * We

    # ---- input slab: the 4 shifted windows of the zero-ring-padded x are
    #      shared by all phases (read once), plus a ones row for the bias. ----
    xpad = jnp.pad(x.astype(jnp.bfloat16), ((0, 0), (0, 0), (1, 1), (1, 1)))
    wins = [xpad[:, :, 1:1 + He, 1:1 + We],   # x[i,   j  ]
            xpad[:, :, 1:1 + He, 0:We],       # x[i,   j-1]
            xpad[:, :, 0:He, 1:1 + We],       # x[i-1, j  ]
            xpad[:, :, 0:He, 0:We],           # x[i-1, j-1]
            jnp.ones((1, N, He, We), jnp.bfloat16)]
    slab = jnp.concatenate(wins, axis=0).reshape(4 * Cin + 1, M)

    # ---- stacked, zero-masked phase weights (bias folded as last column):
    #   y[2i  ,2j  ] = x[i,j]W00 + x[i,j-1]W02 + x[i-1,j]W20 + x[i-1,j-1]W22
    #   y[2i  ,2j+1] = x[i,j]W01 + x[i-1,j]W21
    #   y[2i+1,2j  ] = x[i,j]W10 + x[i,j-1]W12
    #   y[2i+1,2j+1] = x[i,j]W11                                         ----
    def tap(kh, kw):
        return jnp.transpose(Wt[:, :, kh, kw], (1, 0)).astype(jnp.float32)
    zero = jnp.zeros((Cout, Cin), jnp.float32)
    phase_rows = [
        [tap(0, 0), tap(0, 2), tap(2, 0), tap(2, 2)],   # (even row, even col)
        [tap(0, 1), zero, tap(2, 1), zero],             # (even row, odd  col)
        [tap(1, 0), tap(1, 2), zero, zero],             # (odd  row, even col)
        [tap(1, 1), zero, zero, zero],                  # (odd  row, odd  col)
    ]
    wbig = jnp.concatenate([jnp.concatenate(r, axis=1) for r in phase_rows], axis=0)
    bias_col = jnp.tile(bt.reshape(Cout, 1).astype(jnp.float32), (4, 1))
    wbig = jnp.concatenate([wbig, bias_col], axis=1)     # (4*Cout, 4*Cin+1)

    # ---- parity-major skip: one pad+reshape+transpose for all 4 parities
    #      (replaces four lane-sparse stride-2 gathers). ----
    skip_core = jnp.pad(skip_nchw[:, :, :Hy, :Wy].astype(jnp.float32),
                        ((0, 0), (0, 0), (0, 1), (0, 1)))        # (N,C,2He,2We)
    skip_pm = skip_core.reshape(N, Cout, He, 2, We, 2)
    skip_pm = jnp.transpose(skip_pm, (3, 5, 1, 0, 2, 4))         # (pr,pc,C,N,He,We)
    skip_pm = skip_pm.reshape(4 * Cout, M).astype(jnp.bfloat16)

    # ---- one fused pallas_call: 4 phases + bias + leaky_relu + skip merge. ----
    merged_pm = _tiled_call(_level_kernel, [slab, skip_pm], [wbig],
                            4 * Cout, jnp.bfloat16)

    # ---- single interleave pass: parity-major -> (Cout, N, Hy, Wy). ----
    merged = merged_pm.reshape(2, 2, Cout, N, He, We)
    merged = jnp.transpose(merged, (2, 3, 4, 0, 5, 1)).reshape(Cout, N, 2 * He, 2 * We)
    out = merged[:, :, :Hy, :Wy]

    # ---- replicate-pad border (skip may exceed the deconv output by a step).
    #      act = 2*merged - skip is exact; kept in f32 on the bf16 merged so
    #      the strip error stays at bf16 rounding level. ----
    if Ws > Wy:
        edge = jnp.transpose(skip_nchw[:, :, :Hy, Wy - 1:], (1, 0, 2, 3)).astype(jnp.float32)
        act_col = 2.0 * out[:, :, :, Wy - 1:Wy].astype(jnp.float32) - edge[:, :, :, :1]
        out = jnp.concatenate(
            [out, ((act_col + edge[:, :, :, 1:]) * 0.5).astype(out.dtype)], axis=3)
    if Hs > Hy:
        edge = jnp.transpose(skip_nchw[:, :, Hy - 1:, :Ws], (1, 0, 2, 3)).astype(jnp.float32)
        act_row = 2.0 * out[:, :, Hy - 1:Hy, :].astype(jnp.float32) - edge[:, :, :1, :]
        out = jnp.concatenate(
            [out, ((act_row + edge[:, :, 1:, :]) * 0.5).astype(out.dtype)], axis=2)
    return out


# ----------------------------- decoder forward -----------------------------

def decoder_forward_pallas(x_nchw, skips_nchw, params, *, depth):
    # Channel-leading (C, N, H, W) internally: the fused matmuls then store
    # lane-dense outputs (last dim = flattened N*spatial) with no per-level
    # NHWC shuffling; only the network input/output are transposed.
    x = jnp.transpose(x_nchw, (1, 0, 2, 3))
    for d in range(1, depth):
        Wt, bt = params["deconv"][d]          # Wt: (Cin, Cout, 3, 3) torch layout
        x = _decoder_level(x, skips_nchw[d], Wt, bt)

    # output 1x1 conv + sigmoid (lane-dense Pallas matmul over bf16 input)
    Wo_, bo = params["out"]                   # Wo_: (nout, Cin, 1, 1) torch layout
    Cin, N, H, W = x.shape
    nout = Wo_.shape[0]
    x2d = x.reshape(Cin, N * H * W).astype(jnp.bfloat16)
    w1 = Wo_[:, :, 0, 0].astype(jnp.float32)
    b1 = bo.reshape(nout, 1).astype(jnp.float32)
    y = _tiled_call(_out_conv_kernel, [x2d], [w1, b1], nout, jnp.float32)
    return jnp.transpose(y.reshape(nout, N, H, W), (1, 0, 2, 3))   # -> NCHW


# ----------------------------- pure-JAX reference -----------------------------

def decoder_reference(x_nchw, skips, params, *, depth):
    x = x_nchw
    for d in range(1, depth):
        Wt, bt = params["deconv"][d]
        Wf = jnp.transpose(jnp.flip(Wt, axis=(2, 3)), (1, 0, 2, 3))  # OIHW
        x = jax.lax.conv_general_dilated(
            x, Wf, window_strides=(1, 1), padding=((2, 2), (2, 2)),
            lhs_dilation=(2, 2), rhs_dilation=(1, 1),
            dimension_numbers=("NCHW", "OIHW", "NCHW"))
        x = x + bt[None, :, None, None]
        x = jnp.where(x >= 0.0, x, 0.01 * x)
        skip = skips[d]
        pad_h = skip.shape[-2] - x.shape[-2]
        pad_w = skip.shape[-1] - x.shape[-1]
        if pad_h or pad_w:
            x = jnp.pad(x, ((0, 0), (0, 0), (0, pad_h), (0, pad_w)), mode="edge")
        x = (x + skip) / 2.0
    Wo_, bo = params["out"]
    x = jnp.einsum("nchw,oc->nohw", x, Wo_[:, :, 0, 0]) + bo[None, :, None, None]
    return 1.0 / (1.0 + jnp.exp(-x))


# ----------------------------- main -----------------------------

if __name__ == "__main__":
    depth = 3
    nin, nout = 8, 2
    channels = [8, 8, 4]          # channels_list; channels[0] unused (no deconv at d=0)

    key = jax.random.PRNGKey(0)
    keys = jax.random.split(key, 16)
    ki = 0

    # deterministic parameter init (shapes follow the torch module __init__)
    params = {"deconv": [None] * depth, "out": None}
    prev = nin
    for d in range(1, depth):
        fan_in = prev * 9
        Wt = jax.random.normal(keys[ki], (prev, channels[d], 3, 3),
                               jnp.float32) / math.sqrt(fan_in); ki += 1
        bt = 0.05 * jax.random.normal(keys[ki], (channels[d],), jnp.float32); ki += 1
        params["deconv"][d] = (Wt, bt)
        prev = channels[d]
    Wo_ = jax.random.normal(keys[ki], (nout, prev, 1, 1),
                            jnp.float32) / math.sqrt(prev); ki += 1
    bo = 0.05 * jax.random.normal(keys[ki], (nout,), jnp.float32); ki += 1
    params["out"] = (Wo_, bo)

    # inputs (NCHW, like the PyTorch module)
    N, H0 = 2, 5
    x = jax.random.normal(keys[ki], (N, nin, H0, H0), jnp.float32); ki += 1
    skips = [None]
    Hcur = H0
    for d in range(1, depth):
        # d=1: skip exactly matches the deconv output (no pad);
        # d=2: skip is one larger -> exercises the replicate-pad path.
        Hs = 2 * Hcur + 1 + (1 if d == 2 else 0)
        skips.append(jax.random.normal(keys[ki], (N, channels[d], Hs, Hs),
                                       jnp.float32)); ki += 1
        Hcur = Hs

    fwd = jax.jit(functools.partial(decoder_forward_pallas, depth=depth))
    out = jax.block_until_ready(fwd(x, skips, params))

    ref = decoder_reference(x, skips, params, depth=depth)
    assert out.shape == ref.shape, (out.shape, ref.shape)
    err = float(jnp.max(jnp.abs(out - ref)))
    if err > 3e-2:
        raise AssertionError(f"Pallas decoder mismatch vs reference, max abs err={err}")

    print("KERNEL_OK")
</pallas_src>

<mosaic_0001>
module attributes {stable_mosaic.version = 11 : i64} {
  func.func @_level_kernel(%arg0: i32, %arg1: memref<33x128xbf16, #tpu.memory_space<vmem>>, %arg2: memref<32x128xbf16, #tpu.memory_space<vmem>>, %arg3: memref<32x33xf32, #tpu.memory_space<vmem>>, %arg4: memref<32x128xbf16, #tpu.memory_space<vmem>>) attributes {dimension_semantics = [#tpu.dimension_semantics<parallel>], iteration_bounds = array<i64: 1>, scalar_prefetch = 0 : i64, scratch_operands = 0 : i64, tpu.core_type = #tpu.core_type<tc>, window_params = [{transform_indices = @transform_0, window_bounds = array<i64: 33, 128>}, {transform_indices = @transform_1, window_bounds = array<i64: 32, 128>}, {pipeline_mode = #tpu.pipeline_mode<synchronous>, transform_indices = @transform_2, window_bounds = array<i64: 32, 33>}, {transform_indices = @transform_3, window_bounds = array<i64: 32, 128>}]} {
    %c0 = arith.constant 0 : index
    %c0_0 = arith.constant 0 : index
    %0 = vector.load %arg3[%c0, %c0_0] : memref<32x33xf32, #tpu.memory_space<vmem>>, vector<32x33xf32>
    %c0_1 = arith.constant 0 : index
    %c0_2 = arith.constant 0 : index
    %1 = vector.load %arg1[%c0_1, %c0_2] : memref<33x128xbf16, #tpu.memory_space<vmem>>, vector<33x128xbf16>
    %2 = arith.extf %1 : vector<33x128xbf16> to vector<33x128xf32>
    %cst = arith.constant dense<0.000000e+00> : vector<32x128xf32>
    %3 = tpu.matmul %0, %2, %cst {dimension_numbers = #tpu.dot_dimension_numbers<[1], [0], [0], [1], [0, 0, 1, 1], [], []>} : vector<32x33xf32>, vector<33x128xf32>, vector<32x128xf32> -> vector<32x128xf32>
    %cst_3 = arith.constant 0.000000e+00 : f32
    %4 = vector.broadcast %cst_3 : f32 to vector<32x128xf32>
    %5 = arith.cmpf oge, %3, %4 : vector<32x128xf32>
    %cst_4 = arith.constant 0.00999999977 : f32
    %6 = vector.broadcast %cst_4 : f32 to vector<32x128xf32>
    %7 = arith.mulf %6, %3 : vector<32x128xf32>
    %8 = arith.select %5, %3, %7 : vector<32x128xi1>, vector<32x128xf32>
    %c0_5 = arith.constant 0 : index
    %c0_6 = arith.constant 0 : index
    %9 = vector.load %arg2[%c0_5, %c0_6] : memref<32x128xbf16, #tpu.memory_space<vmem>>, vector<32x128xbf16>
    %10 = arith.extf %9 : vector<32x128xbf16> to vector<32x128xf32>
    %11 = arith.addf %8, %10 : vector<32x128xf32>
    %cst_7 = arith.constant 5.000000e-01 : f32
    %12 = vector.broadcast %cst_7 : f32 to vector<32x128xf32>
    %13 = arith.mulf %11, %12 : vector<32x128xf32>
    %14 = arith.truncf %13 : vector<32x128xf32> to vector<32x128xbf16>
    %c0_8 = arith.constant 0 : index
    %c0_9 = arith.constant 0 : index
    %15 = vector.load %arg4[%c0_8, %c0_9] : memref<32x128xbf16, #tpu.memory_space<vmem>>, vector<32x128xbf16>
    tpu.vector_store %arg4[%c0_8, %c0_9], %14 {strides = array<i32>} : memref<32x128xbf16, #tpu.memory_space<vmem>>, vector<32x128xbf16>,
    return
  }
  func.func @transform_0(%arg0: i32) -> (i32, i32) {
    %c0_i32 = arith.constant 0 : i32
    %c0_i32_0 = arith.constant 0 : i32
    return %c0_i32, %arg0 : i32, i32
  }
  func.func @transform_1(%arg0: i32) -> (i32, i32) {
    %c0_i32 = arith.constant 0 : i32
    %c0_i32_0 = arith.constant 0 : i32
    return %c0_i32, %arg0 : i32, i32
  }
  func.func @transform_2(%arg0: i32) -> (i32, i32) {
    %c0_i32 = arith.constant 0 : i32
    %c0_i32_0 = arith.constant 0 : i32
    %c0_i32_1 = arith.constant 0 : i32
    return %c0_i32, %c0_i32_0 : i32, i32
  }
  func.func @transform_3(%arg0: i32) -> (i32, i32) {
    %c0_i32 = arith.constant 0 : i32
    %c0_i32_0 = arith.constant 0 : i32
    return %c0_i32, %arg0 : i32, i32
  }
}

module attributes {stable_mosaic.version = 11 : i64} {
  func.func @_level_kernel(%arg0: i32, %arg1: memref<33x256xbf16, #tpu.memory_space<vmem>>, %arg2: memref<16x256xbf16, #tpu.memory_space<vmem>>, %arg3: memref<16x33xf32, #tpu.memory_space<vmem>>, %arg4: memref<16x256xbf16, #tpu.memory_space<vmem>>) attributes {dimension_semantics = [#tpu.dimension_semantics<parallel>], iteration_bounds = array<i64: 2>, scalar_prefetch = 0 : i64, scratch_operands = 0 : i64, tpu.core_type = #tpu.core_type<tc>, window_params = [{transform_indices = @transform_0, window_bounds = array<i64: 33, 256>}, {transform_indices = @transform_1, window_bounds = array<i64: 16, 256>}, {pipeline_mode = #tpu.pipeline_mode<synchronous>, transform_indices = @transform_2, window_bounds = array<i64: 16, 33>}, {transform_indices = @transform_3, window_bounds = array<i64: 16, 256>}]} {
    %c0 = arith.constant 0 : index
    %c0_0 = arith.constant 0 : index
    %0 = vector.load %arg3[%c0, %c0_0] : memref<16x33xf32, #tpu.memory_space<vmem>>, vector<16x33xf32>
    %c0_1 = arith.constant 0 : index
    %c0_2 = arith.constant 0 : index
    %1 = vector.load %arg1[%c0_1, %c0_2] : memref<33x256xbf16, #tpu.memory_space<vmem>>, vector<33x256xbf16>
    %2 = arith.extf %1 : vector<33x256xbf16> to vector<33x256xf32>
    %cst = arith.constant dense<0.000000e+00> : vector<16x256xf32>
    %3 = tpu.matmul %0, %2, %cst {dimension_numbers = #tpu.dot_dimension_numbers<[1], [0], [0], [1], [0, 0, 1, 1], [], []>} : vector<16x33xf32>, vector<33x256xf32>, vector<16x256xf32> -> vector<16x256xf32>
    %cst_3 = arith.constant 0.000000e+00 : f32
    %4 = vector.broadcast %cst_3 : f32 to vector<16x256xf32>
    %5 = arith.cmpf oge, %3, %4 : vector<16x256xf32>
    %cst_4 = arith.constant 0.00999999977 : f32
    %6 = vector.broadcast %cst_4 : f32 to vector<16x256xf32>
    %7 = arith.mulf %6, %3 : vector<16x256xf32>
    %8 = arith.select %5, %3, %7 : vector<16x256xi1>, vector<16x256xf32>
    %c0_5 = arith.constant 0 : index
    %c0_6 = arith.constant 0 : index
    %9 = vector.load %arg2[%c0_5, %c0_6] : memref<16x256xbf16, #tpu.memory_space<vmem>>, vector<16x256xbf16>
    %10 = arith.extf %9 : vector<16x256xbf16> to vector<16x256xf32>
    %11 = arith.addf %8, %10 : vector<16x256xf32>
    %cst_7 = arith.constant 5.000000e-01 : f32
    %12 = vector.broadcast %cst_7 : f32 to vector<16x256xf32>
    %13 = arith.mulf %11, %12 : vector<16x256xf32>
    %14 = arith.truncf %13 : vector<16x256xf32> to vector<16x256xbf16>
    %c0_8 = arith.constant 0 : index
    %c0_9 = arith.constant 0 : index
    %15 = vector.load %arg4[%c0_8, %c0_9] : memref<16x256xbf16, #tpu.memory_space<vmem>>, vector<16x256xbf16>
    tpu.vector_store %arg4[%c0_8, %c0_9], %14 {strides = array<i32>} : memref<16x256xbf16, #tpu.memory_space<vmem>>, vector<16x256xbf16>,
    return
  }
  func.func @transform_0(%arg0: i32) -> (i32, i32) {
    %c0_i32 = arith.constant 0 : i32
    %c0_i32_0 = arith.constant 0 : i32
    return %c0_i32, %arg0 : i32, i32
  }
  func.func @transform_1(%arg0: i32) -> (i32, i32) {
    %c0_i32 = arith.constant 0 : i32
    %c0_i32_0 = arith.constant 0 : i32
    return %c0_i32, %arg0 : i32, i32
  }
  func.func @transform_2(%arg0: i32) -> (i32, i32) {
    %c0_i32 = arith.constant 0 : i32
    %c0_i32_0 = arith.constant 0 : i32
    %c0_i32_1 = arith.constant 0 : i32
    return %c0_i32, %c0_i32_0 : i32, i32
  }
  func.func @transform_3(%arg0: i32) -> (i32, i32) {
    %c0_i32 = arith.constant 0 : i32
    %c0_i32_0 = arith.constant 0 : i32
    return %c0_i32, %arg0 : i32, i32
  }
}

module attributes {stable_mosaic.version = 11 : i64} {
  func.func @_out_conv_kernel(%arg0: i32, %arg1: memref<4x640xbf16, #tpu.memory_space<vmem>>, %arg2: memref<2x4xf32, #tpu.memory_space<vmem>>, %arg3: memref<2x1xf32, #tpu.memory_space<vmem>>, %arg4: memref<2x640xf32, #tpu.memory_space<vmem>>) attributes {dimension_semantics = [#tpu.dimension_semantics<parallel>], iteration_bounds = array<i64: 2>, scalar_prefetch = 0 : i64, scratch_operands = 0 : i64, tpu.core_type = #tpu.core_type<tc>, window_params = [{transform_indices = @transform_0, window_bounds = array<i64: 4, 640>}, {pipeline_mode = #tpu.pipeline_mode<synchronous>, transform_indices = @transform_1, window_bounds = array<i64: 2, 4>}, {pipeline_mode = #tpu.pipeline_mode<synchronous>, transform_indices = @transform_2, window_bounds = array<i64: 2, 1>}, {transform_indices = @transform_3, window_bounds = array<i64: 2, 640>}]} {
    %c0 = arith.constant 0 : index
    %c0_0 = arith.constant 0 : index
    %0 = vector.load %arg2[%c0, %c0_0] : memref<2x4xf32, #tpu.memory_space<vmem>>, vector<2x4xf32>
    %c0_1 = arith.constant 0 : index
    %c0_2 = arith.constant 0 : index
    %1 = vector.load %arg1[%c0_1, %c0_2] : memref<4x640xbf16, #tpu.memory_space<vmem>>, vector<4x640xbf16>
    %2 = arith.extf %1 : vector<4x640xbf16> to vector<4x640xf32>
    %cst = arith.constant dense<0.000000e+00> : vector<2x640xf32>
    %3 = tpu.matmul %0, %2, %cst {dimension_numbers = #tpu.dot_dimension_numbers<[1], [0], [0], [1], [0, 0, 1, 1], [], []>} : vector<2x4xf32>, vector<4x640xf32>, vector<2x640xf32> -> vector<2x640xf32>
    %c0_3 = arith.constant 0 : index
    %c0_4 = arith.constant 0 : index
    %4 = vector.load %arg3[%c0_3, %c0_4] : memref<2x1xf32, #tpu.memory_space<vmem>>, vector<2x1xf32>
    %5 = vector.broadcast %4 : vector<2x1xf32> to vector<2x640xf32>
    %6 = arith.addf %3, %5 : vector<2x640xf32>
    %7 = math.absf %6 : vector<2x640xf32>
    %cst_5 = arith.constant 0.000000e+00 : f32
    %8 = vector.broadcast %cst_5 : f32 to vector<2x640xf32>
    %9 = arith.subf %8, %7 : vector<2x640xf32>
    %10 = math.exp %9 : vector<2x640xf32>
    %cst_6 = arith.constant 1.000000e+00 : f32
    %11 = vector.broadcast %cst_6 : f32 to vector<2x640xf32>
    %12 = arith.addf %11, %10 : vector<2x640xf32>
    %cst_7 = arith.constant 1.000000e+00 : f32
    %13 = vector.broadcast %cst_7 : f32 to vector<2x640xf32>
    %14 = arith.divf %13, %12 : vector<2x640xf32>
    %cst_8 = arith.constant 0.000000e+00 : f32
    %15 = vector.broadcast %cst_8 : f32 to vector<2x640xf32>
    %16 = arith.cmpf oge, %6, %15 : vector<2x640xf32>
    %cst_9 = arith.constant 1.000000e+00 : f32
    %17 = vector.broadcast %cst_9 : f32 to vector<2x640xf32>
    %18 = arith.subf %17, %14 : vector<2x640xf32>
    %19 = arith.select %16, %14, %18 : vector<2x640xi1>, vector<2x640xf32>
    %c0_10 = arith.constant 0 : index
    %c0_11 = arith.constant 0 : index
    %20 = vector.load %arg4[%c0_10, %c0_11] : memref<2x640xf32, #tpu.memory_space<vmem>>, vector<2x640xf32>
    tpu.vector_store %arg4[%c0_10, %c0_11], %19 {strides = array<i32>} : memref<2x640xf32, #tpu.memory_space<vmem>>, vector<2x640xf32>,
    return
  }
  func.func @transform_0(%arg0: i32) -> (i32, i32) {
    %c0_i32 = arith.constant 0 : i32
    %c0_i32_0 = arith.constant 0 : i32
    return %c0_i32, %arg0 : i32, i32
  }
  func.func @transform_1(%arg0: i32) -> (i32, i32) {
    %c0_i32 = arith.constant 0 : i32
    %c0_i32_0 = arith.constant 0 : i32
    %c0_i32_1 = arith.constant 0 : i32
    return %c0_i32, %c0_i32_0 : i32, i32
  }
  func.func @transform_2(%arg0: i32) -> (i32, i32) {
    %c0_i32 = arith.constant 0 : i32
    %c0_i32_0 = arith.constant 0 : i32
    %c0_i32_1 = arith.constant 0 : i32
    return %c0_i32, %c0_i32_0 : i32, i32
  }
  func.func @transform_3(%arg0: i32) -> (i32, i32) {
    %c0_i32 = arith.constant 0 : i32
    %c0_i32_0 = arith.constant 0 : i32
    return %c0_i32, %arg0 : i32, i32
  }
}

</mosaic_0001>

<llo_original>
// kernel: decoder_forward_pallas.3
$region0: #{decoder_forward_pallas.3}
  #allocation0 [shape = 'u32[]', space=smem, size = 0x4, offset = 0x4, fixed_abs, tag = 'smem constant byte address 0x4 - core index']
  #allocation1 [shape = 'u32[144,128]{1,0:T(1,128)}', space=vmem, size = 0x12000, scoped, tag = 'internal scratch']
  %s0 = inlined_call_operand.vmem [shape: bf16[33,128], index: 0, kind: input, shape index: {}]
  %s1 = inlined_call_operand.vmem [shape: bf16[32,128], index: 1, kind: input, shape index: {}]
  %s2 = inlined_call_operand.vmem [shape: f32[32,33], index: 2, kind: input, shape index: {}]
  %s3 = inlined_call_operand.vmem [shape: bf16[32,128], index: 3, kind: output, shape index: {}]
  %s4 = sld [smem:[#allocation0]]
  $region22: #{decoder_forward_pallas.3} parent=0
    _
  %s6 = ssub.s32 1, %s4
  %s7 = scalar_select 0, %s6, %s4
  // Predicated region
  $region2: #{decoder_forward_pallas.3} parent=0 // pred_check
    _
  $region3: #{decoder_forward_pallas.3} parent=0 // pred_check_branch
    %9 = sbr.rel (0) target = $region5
  $region4: #{decoder_forward_pallas.3} parent=0 // pred_region
    _
  $region5: #{decoder_forward_pallas.3} parent=0 // pred_fallthru
    _
  // Predicated region
  $region6: #{decoder_forward_pallas.3} parent=0 // pred_check
    _
  $region7: #{decoder_forward_pallas.3} parent=0 // pred_check_branch
    %11 = sbr.rel (0) target = $region9
  $region8: #{decoder_forward_pallas.3} parent=0 // pred_region
    _
  $region9: #{decoder_forward_pallas.3} parent=0 // pred_fallthru
    _
  // Predicated region
  $region10: #{decoder_forward_pallas.3} parent=0 // pred_check
    _
  $region11: #{decoder_forward_pallas.3} parent=0 // pred_check_branch
    %13 = sbr.rel (0) target = $region13
  $region12: #{decoder_forward_pallas.3} parent=0 // pred_region
    _
  $region13: #{decoder_forward_pallas.3} parent=0 // pred_fallthru
    _
  %v14 = vld [vmem:[%s2] sm:$0xff]
  %v15 = vld [vmem:[%s2 + $0x8] sm:$0xff]
  %v16 = vld [vmem:[%s2 + $0x10] sm:$0xff]
  %v17 = vld [vmem:[%s2 + $0x18] sm:$0xff]
  %v18 = vld [vmem:[%s0] sm:$0xf]
  %v19 = vld [vmem:[%s0 + $0x4] sm:$0xf]
  %v20 = vld [vmem:[%s0 + $0x8] sm:$0xf]
  %v21 = vld [vmem:[%s0 + $0xc] sm:$0xf]
  %v22 = vld [vmem:[%s0 + $0x10] sm:$0x1]
  %v23 = vunpack.c.l.bf16 %v18
  %v24 = vunpack.c.l.bf16 %v19
  %v25 = vunpack.c.l.bf16 %v20
  %v26 = vunpack.c.l.bf16 %v21
  %v27 = vunpack.c.l.bf16 %v22
  %vm28 = vcmask 269312
  %v30 = vsel %vm28, %v14, 0
  %v33 = vsel %vm28, %v15, 0
  %v36 = vsel %vm28, %v16, 0
  %v39 = vsel %vm28, %v17, 0
  %vm41 = vcmask 1040384
  %v43 = vsel %vm41, %v27, 0
  %45 = vmatprep.subr.mxu0 0.0
  %46 = vmatpush1.msra.mxu0 %v23
  %47 = vmatprep.subr.mxu0 0.0
  %48 = vmatpush1.msra.mxu0 %v24
  %49 = vmatprep.subr.mxu0 0.0
  %50 = vmatpush1.msra.mxu0 %v25
  %51 = vmatprep.subr.mxu0 0.0
  %52 = vmatpush1.msra.mxu0 %v26
  %53 = vmatprep.subr.mxu0 0.0
  %54 = vmatpush1.msra.mxu0 %v43
  %55 = vmatprep.subr.mxu0 0.0
  %56 = vmatpush1.msra.mxu0 0.0
  %57 = vmatprep.subr.mxu0 0.0
  %58 = vmatpush1.msra.mxu0 0.0
  %59 = vmatprep.subr.mxu0 0.0
  %60 = vmatpush1.msra.mxu0 0.0
  %61 = vmatprep.subr.mxu0 0.0
  %62 = vmatpush1.msra.mxu0 0.0
  %63 = vmatprep.subr.mxu0 0.0
  %64 = vmatpush1.msra.mxu0 0.0
  %65 = vmatprep.subr.mxu0 0.0
  %66 = vmatpush1.msra.mxu0 0.0
  %67 = vmatprep.subr.mxu0 0.0
  %68 = vmatpush1.msra.mxu0 0.0
  %69 = vmatprep.subr.mxu0 0.0
  %70 = vmatpush1.msra.mxu0 0.0
  %71 = vmatprep.subr.mxu0 0.0
  %72 = vmatpush1.msra.mxu0 0.0
  %73 = vmatprep.subr.mxu0 0.0
  %74 = vmatpush1.msra.mxu0 0.0
  %75 = vmatprep.subr.mxu0 0.0
  %76 = vmatpush1.msra.mxu0 0.0
  %77 = vmatprep.subr.mxu0 0.0
  %78 = vmatpush1.msra.mxu0 0.0
  %79 = vmatprep.subr.mxu0 0.0
  %80 = vmatpush1.msra.mxu0 0.0
  %81 = vmatprep.subr.mxu0 0.0
  %82 = vmatpush1.msra.mxu0 0.0
  %83 = vmatprep.subr.mxu0 0.0
  %84 = vmatpush1.msra.mxu0 0.0
  %85 = vmatprep.subr.mxu0 0.0
  %86 = vmatpush1.msra.mxu0 0.0
  %87 = vmatprep.subr.mxu0 0.0
  %88 = vmatpush1.msra.mxu0 0.0
  %89 = vmatprep.subr.mxu0 0.0
  %90 = vmatpush1.msra.mxu0 0.0
  %91 = vmatprep.subr.mxu0 0.0
  %92 = vmatpush1.msra.mxu0 0.0
  %93 = vmatprep.subr.mxu0 0.0
  %94 = vmatpush1.msra.mxu0 0.0
  %95 = vmatprep.subr.mxu0 0.0
  %96 = vmatpush1.msra.mxu0 0.0
  %97 = vmatprep.subr.mxu0 0.0
  %98 = vmatpush1.msra.mxu0 0.0
  %99 = vmatprep.subr.mxu0 0.0
  %100 = vmatpush1.msra.mxu0 0.0
  %101 = vmatprep.subr.mxu0 0.0
  %102 = vmatpush1.msra.mxu0 0.0
  %103 = vmatprep.subr.mxu0 0.0
  %104 = vmatpush1.msra.mxu0 0.0
  %105 = vmatprep.subr.mxu0 0.0
  %106 = vmatpush1.msra.mxu0 0.0
  %107 = vmatprep.subr.mxu0 0.0
  %108 = vmatpush1.msra.mxu0 0.0
  %109 = vmatprep.mubr.f32.mxu0 0.0
  %110 = vmatmul.mubr.f32.gmra.mrb[0].mxu0 %v30
  %v111 = vpop.f32.mrb[0].mxu0
  %v112 = vadd.f32 0.0, %v111
  %v113 = vpop.f32.mrb[0].mxu0
  %114 = vmatprep.mubr.f32.mxu0 0.0
  %115 = vmatmul.mubr.f32.gmra.mrb[0].mxu0 %v33
  %v116 = vpop.f32.mrb[0].mxu0
  %v117 = vadd.f32 0.0, %v116
  %v118 = vpop.f32.mrb[0].mxu0
  %119 = vmatprep.mubr.f32.mxu0 0.0
  %120 = vmatmul.mubr.f32.gmra.mrb[0].mxu0 %v36
  %v121 = vpop.f32.mrb[0].mxu0
  %v122 = vadd.f32 0.0, %v121
  %v123 = vpop.f32.mrb[0].mxu0
  %124 = vmatprep.mubr.f32.mxu0 0.0
  %125 = vmatmul.mubr.f32.gmra.mrb[0].mxu0 %v39
  %v126 = vpop.f32.mrb[0].mxu0
  %v127 = vadd.f32 0.0, %v126
  %v128 = vpop.f32.mrb[0].mxu0
  %129 = vdwg.mxu0
  %vm130 = vcmp.ge.f32.partialorder %v112, 0.0
  %vm131 = vcmp.ge.f32.partialorder %v117, 0.0
  %vm132 = vcmp.ge.f32.partialorder %v122, 0.0
  %vm133 = vcmp.ge.f32.partialorder %v127, 0.0
  %v134 = vmul.f32 %v112, 0.01
  %v135 = vmul.f32 %v117, 0.01
  %v136 = vmul.f32 %v122, 0.01
  %v137 = vmul.f32 %v127, 0.01
  %v138 = vsel %vm130, %v112, %v134
  %v139 = vsel %vm131, %v117, %v135
  %v140 = vsel %vm132, %v122, %v136
  %v141 = vsel %vm133, %v127, %v137
  %v142 = vld [vmem:[%s1] sm:$0xf]
  %v143 = vld [vmem:[%s1 + $0x4] sm:$0xf]
  %v144 = vld [vmem:[%s1 + $0x8] sm:$0xf]
  %v145 = vld [vmem:[%s1 + $0xc] sm:$0xf]
  %v146 = vunpack.c.l.bf16 %v142
  %v147 = vunpack.c.l.bf16 %v143
  %v148 = vunpack.c.l.bf16 %v144
  %v149 = vunpack.c.l.bf16 %v145
  %v150 = vadd.f32 %v138, %v146
  %v151 = vadd.f32 %v139, %v147
  %v152 = vadd.f32 %v140, %v148
  %v153 = vadd.f32 %v141, %v149
  %v154 = vmul.f32 %v150, 0.5
  %v155 = vmul.f32 %v151, 0.5
  %v156 = vmul.f32 %v152, 0.5
  %v157 = vmul.f32 %v153, 0.5
  %v158 = vpack.c.bf16 %v155, %v154
  %v159 = vpack.c.bf16 %v157, %v156
  %v162 = vunpack.c.l.b16 %v158
  %v163 = vunpack.c.h.b16 %v158
  %v164 = vunpack.c.l.b16 %v159
  %v165 = vunpack.c.h.b16 %v159
  %v166 = vpack.c.b16 %v162, %v162
  %v167 = vpack.c.b16 %v163, %v163
  %v168 = vpack.c.b16 %v164, %v164
  %v169 = vpack.c.b16 %v165, %v165
  %174 = vst [vmem:[%s3] sm:$0xf] %v166
  %175 = vst [vmem:[%s3 + $0x4] sm:$0xf] %v167
  %176 = vst [vmem:[%s3 + $0x8] sm:$0xf] %v168
  %177 = vst [vmem:[%s3 + $0xc] sm:$0xf] %v169
  // Predicated region
  $region14: #{decoder_forward_pallas.3} parent=0 // pred_check
    _
  $region15: #{decoder_forward_pallas.3} parent=0 // pred_check_branch
    %179 = sbr.rel (0) target = $region17
  $region16: #{decoder_forward_pallas.3} parent=0 // pred_region
    _
  $region17: #{decoder_forward_pallas.3} parent=0 // pred_fallthru
    _
  // Predicated region
  $region18: #{decoder_forward_pallas.3} parent=0 // pred_check
    _
  $region19: #{decoder_forward_pallas.3} parent=0 // pred_check_branch
    %181 = sbr.rel (0) target = $region21
  $region20: #{decoder_forward_pallas.3} parent=0 // pred_region
    _
  $region21: #{decoder_forward_pallas.3} parent=0 // pred_fallthru
    _

// kernel: decoder_forward_pallas.4
$region0: #{decoder_forward_pallas.4}
  #allocation0 [shape = 'u32[]', space=smem, size = 0x4, offset = 0x4, fixed_abs, tag = 'smem constant byte address 0x4 - core index']
  #allocation1 [shape = 'u32[144,128]{1,0:T(1,128)}', space=vmem, size = 0x12000, scoped, tag = 'internal scratch']
  %s0 = inlined_call_operand.vmem [shape: bf16[33,512], index: 0, kind: input, shape index: {}]
  %s1 = inlined_call_operand.vmem [shape: bf16[16,512], index: 1, kind: input, shape index: {}]
  %s2 = inlined_call_operand.vmem [shape: f32[16,33], index: 2, kind: input, shape index: {}]
  %s3 = inlined_call_operand.vmem [shape: bf16[16,512], index: 3, kind: output, shape index: {}]
  %s4 = sld [smem:[#allocation0]]
  $region155: #{decoder_forward_pallas.4} parent=0
    _
  %s6 = ssub.s32 1, %s4
  %s7 = scalar_select 0, %s6, %s4
  $region1: #{decoder_forward_pallas.4} parent=0
    #allocation2 [shape = 'u8[40960]{0}', space=vmem, size = 0xa000, scoped, tag = 'input window, operand 0']
    #allocation3 [shape = 'u8[16384]{0}', space=vmem, size = 0x4000, scoped, tag = 'input window, operand 1']
    #allocation4 [shape = 'u8[16384]{0}', space=vmem, size = 0x4000, scoped, tag = 'output window, operand 0']
    loop: start=0, step=1, limit=4
    $region2: #{decoder_forward_pallas.4} parent=1 // loop_pre_header
      _
    $region3: #{decoder_forward_pallas.4} parent=1 // loop_header
      %s9 = sphi 0, %s13
      %p10 = scmp.ge.s32.totalorder %s9, 4
      %s19 = sphi 0, %s21
      %s22 = sphi 0, %s19
      %s23 = sphi 0, %s22
      %s39 = sphi 0, %s23
      %s45 = sphi 0, %s47
      %s48 = sphi 0, %s45
      %s49 = sphi 0, %s48
      %s65 = sphi 0, %s49
      %s69 = sphi 0, %s69
      %s71 = sphi 0, %s69
      %s72 = sphi 0, %s71
      %s86 = sphi 0, %s72
      %s92 = sphi 0, %s94
      %s95 = sphi 0, %s92
      %s96 = sphi 0, %s95
      %s112 = sphi 0, %s96
    $region4: #{decoder_forward_pallas.4} parent=1 // loop_header_branch
      %12 = sbr.rel (%p10) target = $region8
    $region5: #{decoder_forward_pallas.4} parent=1 // loop_body
      %s14 = ssub.s32 %s9, 1
      %s15 = ssub.s32 %s9, 2
      %s16 = sadd.s32 %s9, 1
      %s17 = ssub.s32 %s9, %s16
      %p18 = scmp.eq.s32.totalorder %s17, 0
      %s20 = sadd.s32 %s19, 1
      %s21 = scalar_select %p18, %s19, %s20
      %p24 = pneg %p18
      %p25 = scmp.eq.s32.totalorder %s9, 1
      %p26 = por %p24, %p25
      %p27 = scmp.ne.s32.totalorder %s19, %s22
      %p28 = scmp.eq.s32.totalorder %s9, 0
      %p29 = por %p27, %p28
      %p30 = scmp.ne.s32.totalorder %s19, %s22
      %p31 = scmp.eq.s32.totalorder %s14, 1
      %p32 = por %p30, %p31
      %p33 = scmp.ne.s32.totalorder %s22, %s23
      %p34 = scmp.eq.s32.totalorder %s14, 0
      %p35 = por %p33, %p34
      %p36 = scmp.ne.s32.totalorder %s22, %s23
      %p37 = scmp.eq.s32.totalorder %s15, 1
      %p38 = por %p36, %p37
      %p40 = scmp.ne.s32.totalorder %s23, %s39
      %p41 = scmp.eq.s32.totalorder %s15, 0
      %p42 = por %p40, %p41
      %s43 = ssub.s32 %s9, %s16
      %p44 = scmp.eq.s32.totalorder %s43, 0
      %s46 = sadd.s32 %s45, 1
      %s47 = scalar_select %p44, %s45, %s46
      %p50 = pneg %p44
      %p51 = scmp.eq.s32.totalorder %s9, 1
      %p52 = por %p50, %p51
      %p53 = scmp.ne.s32.totalorder %s45, %s48
      %p54 = scmp.eq.s32.totalorder %s9, 0
      %p55 = por %p53, %p54
      %p56 = scmp.ne.s32.totalorder %s45, %s48
      %p57 = scmp.eq.s32.totalorder %s14, 1
      %p58 = por %p56, %p57
      %p59 = scmp.ne.s32.totalorder %s48, %s49
      %p60 = scmp.eq.s32.totalorder %s14, 0
      %p61 = por %p59, %p60
      %p62 = scmp.ne.s32.totalorder %s48, %s49
      %p63 = scmp.eq.s32.totalorder %s15, 1
      %p64 = por %p62, %p63
      %p66 = scmp.ne.s32.totalorder %s49, %s65
      %p67 = scmp.eq.s32.totalorder %s15, 0
      %p68 = por %p66, %p67
      %s70 = sadd.s32 %s69, 1
      %p73 = scmp.eq.s32.totalorder %s9, 1
      %p74 = scmp.ne.s32.totalorder %s69, %s71
      %p75 = scmp.eq.s32.totalorder %s9, 0
      %p76 = por %p74, %p75
      %p77 = scmp.ne.s32.totalorder %s69, %s71
      %p78 = scmp.eq.s32.totalorder %s14, 1
      %p79 = por %p77, %p78
      %p80 = scmp.ne.s32.totalorder %s71, %s72
      %p81 = scmp.eq.s32.totalorder %s14, 0
      %p82 = por %p80, %p81
      %p83 = scmp.ne.s32.totalorder %s71, %s72
      %p84 = scmp.eq.s32.totalorder %s15, 1
      %p85 = por %p83, %p84
      %p87 = scmp.ne.s32.totalorder %s72, %s86
      %p88 = scmp.eq.s32.totalorder %s15, 0
      %p89 = por %p87, %p88
      %s90 = ssub.s32 %s9, %s16
      %p91 = scmp.eq.s32.totalorder %s90, 0
      %s93 = sadd.s32 %s92, 1
      %s94 = scalar_select %p91, %s92, %s93
      %p97 = pneg %p91
      %p98 = scmp.eq.s32.totalorder %s9, 1
      %p99 = por %p97, %p98
      %p100 = scmp.ne.s32.totalorder %s92, %s95
      %p101 = scmp.eq.s32.totalorder %s9, 0
      %p102 = por %p100, %p101
      %p103 = scmp.ne.s32.totalorder %s92, %s95
      %p104 = scmp.eq.s32.totalorder %s14, 1
      %p105 = por %p103, %p104
      %p106 = scmp.ne.s32.totalorder %s95, %s96
      %p107 = scmp.eq.s32.totalorder %s14, 0
      %p108 = por %p106, %p107
      %p109 = scmp.ne.s32.totalorder %s95, %s96
      %p110 = scmp.eq.s32.totalorder %s15, 1
      %p111 = por %p109, %p110
      %p113 = scmp.ne.s32.totalorder %s96, %s112
      %p114 = scmp.eq.s32.totalorder %s15, 0
      %p115 = por %p113, %p114
      %p116 = scmp.le.s32.totalorder 1, %s9
      %p117 = scmp.lt.s32.totalorder %s9, 3
      %p118 = pnand %p116, %p117
      %p119 = pneg %p118
      // Predicated region
      $region9: #{decoder_forward_pallas.4} parent=5 // pred_check
        _
      $region10: #{decoder_forward_pallas.4} parent=5 // pred_check_branch
        %121 = sbr.rel (%p118) target = $region12
      $region11: #{decoder_forward_pallas.4} parent=5 // pred_region
        %s122 = ssub.s32 %s9, 1
        // Predicated region
        $region13: #{decoder_forward_pallas.4} parent=11 // pred_check
          %p123 = pneg %p82
        $region14: #{decoder_forward_pallas.4} parent=11 // pred_check_branch
          %125 = sbr.rel (%p123) target = $region16
        $region15: #{decoder_forward_pallas.4} parent=11 // pred_region
          _
        $region16: #{decoder_forward_pallas.4} parent=11 // pred_fallthru
          _
      $region12: #{decoder_forward_pallas.4} parent=5 // pred_fallthru
        _
      %p126 = scmp.lt.s32.totalorder %s9, 2
      // Predicated region
      $region17: #{decoder_forward_pallas.4} parent=5 // pred_check
        %p127 = pneg %p126
      $region18: #{decoder_forward_pallas.4} parent=5 // pred_check_branch
        %129 = sbr.rel (%p127) target = $region20
      $region19: #{decoder_forward_pallas.4} parent=5 // pred_region
        // Predicated region
        $region21: #{decoder_forward_pallas.4} parent=19 // pred_check
          %p130 = pneg %p29
        $region22: #{decoder_forward_pallas.4} parent=19 // pred_check_branch
          %132 = sbr.rel (%p130) target = $region24
        $region23: #{decoder_forward_pallas.4} parent=19 // pred_region
          %s133 = sand.u32 %s19, 1
          %s134 = sand.u32 %s19, 1
          %s135 = smul.addr %s134, 40
          %s136 = scalar_lea.vmem [#allocation2], %s135
          %s137 = smul.u32 2, %s9
          %s138 = smul.addr %s137, 4
          %s139 = scalar_lea.vmem %s0, %s138
          // Predicated region
          $region25: #{decoder_forward_pallas.4} parent=23 // pred_check
            _
          $region26: #{decoder_forward_pallas.4} parent=23 // pred_check_branch
            %141 = sbr.rel (0) target = $region28
          $region27: #{decoder_forward_pallas.4} parent=23 // pred_region
            // Predicated region
            $region29: #{decoder_forward_pallas.4} parent=27 // pred_check
              _
            $region30: #{decoder_forward_pallas.4} parent=27 // pred_check_branch
              %143 = sbr.rel (0) target = $region32
            $region31: #{decoder_forward_pallas.4} parent=27 // pred_region
              // Predicated region
              $region44: #{decoder_forward_pallas.4} parent=31 // pred_check
                _
              $region45: #{decoder_forward_pallas.4} parent=31 // pred_check_branch
                %166 = sbr.rel (0) target = $region47
              $region46: #{decoder_forward_pallas.4} parent=31 // pred_region
                loop: start=0, step=1, limit=1
                $region48: #{decoder_forward_pallas.4} parent=46 // loop_pre_header
                  _
                $region49: #{decoder_forward_pallas.4} parent=46 // loop_header
                  %s168 = sphi 0, %s172
                  %p169 = scmp.ge.s32.totalorder %s168, 1
                  %s173 = sphi %s139, %s139
                  %s174 = sphi %s136, %s136
                $region50: #{decoder_forward_pallas.4} parent=46 // loop_header_branch
                  %171 = sbr.rel (%p169) target = $region54
                $region51: #{decoder_forward_pallas.4} parent=46 // loop_body
                  %v175 = vld [vmem:[%s173] sm:$0xff]
                  %176 = vst [vmem:[%s174] sm:$0xff] %v175
                  %v177 = vld [vmem:[%s173 + $0x10] sm:$0xff]
                  %178 = vst [vmem:[%s174 + $0x8] sm:$0xff] %v177
                  %v179 = vld [vmem:[%s173 + $0x20] sm:$0xff]
                  %180 = vst [vmem:[%s174 + $0x10] sm:$0xff] %v179
                  %v181 = vld [vmem:[%s173 + $0x30] sm:$0xff]
                  %182 = vst [vmem:[%s174 + $0x18] sm:$0xff] %v181
                  %v183 = vld [vmem:[%s173 + $0x40] sm:$0xff]
                  %184 = vst [vmem:[%s174 + $0x20] sm:$0xff] %v183
                $region52: #{decoder_forward_pallas.4} parent=46 // loop_footer
                  %s172 = sadd.s32 1, %s168
                $region53: #{decoder_forward_pallas.4} parent=46 // loop_footer_branch
                  %167 = sbr.rel target = $region49
                $region54: #{decoder_forward_pallas.4} parent=46 // loop_exit
                  _
              $region47: #{decoder_forward_pallas.4} parent=31 // pred_fallthru
                _
              // Predicated region
              $region55: #{decoder_forward_pallas.4} parent=31 // pred_check
                _
              $region56: #{decoder_forward_pallas.4} parent=31 // pred_check_branch
                %186 = sbr.rel target = $region58
              $region57: #{decoder_forward_pallas.4} parent=31 // pred_region
                _
              $region58: #{decoder_forward_pallas.4} parent=31 // pred_fallthru
                _
            $region32: #{decoder_forward_pallas.4} parent=27 // pred_fallthru
              _
            // Predicated region
            $region33: #{decoder_forward_pallas.4} parent=27 // pred_check
              _
            $region34: #{decoder_forward_pallas.4} parent=27 // pred_check_branch
              %145 = sbr.rel target = $region36
            $region35: #{decoder_forward_pallas.4} parent=27 // pred_region
              loop: start=0, step=1, limit=1
              $region37: #{decoder_forward_pallas.4} parent=35 // loop_pre_header
                _
              $region38: #{decoder_forward_pallas.4} parent=35 // loop_header
                %s148 = sphi 0, %s152
                %p149 = scmp.ge.s32.totalorder %s148, 1
                %s153 = sphi %s139, %s139
                %s154 = sphi %s136, %s136
              $region39: #{decoder_forward_pallas.4} parent=35 // loop_header_branch
                %151 = sbr.rel (%p149) target = $region43
              $region40: #{decoder_forward_pallas.4} parent=35 // loop_body
                %v155 = vld [vmem:[%s153] sm:$0xff]
                %156 = vst [vmem:[%s154] sm:$0xff] %v155
                %v157 = vld [vmem:[%s153 + $0x10] sm:$0xff]
                %158 = vst [vmem:[%s154 + $0x8] sm:$0xff] %v157
                %v159 = vld [vmem:[%s153 + $0x20] sm:$0xff]
                %160 = vst [vmem:[%s154 + $0x10] sm:$0xff] %v159
                %v161 = vld [vmem:[%s153 + $0x30] sm:$0xff]
                %162 = vst [vmem:[%s154 + $0x18] sm:$0xff] %v161
                %v163 = vld [vmem:[%s153 + $0x40] sm:$0xff]
                %164 = vst [vmem:[%s154 + $0x20] sm:$0xff] %v163
              $region41: #{decoder_forward_pallas.4} parent=35 // loop_footer
                %s152 = sadd.s32 1, %s148
              $region42: #{decoder_forward_pallas.4} parent=35 // loop_footer_branch
                %147 = sbr.rel target = $region38
              $region43: #{decoder_forward_pallas.4} parent=35 // loop_exit
                _
            $region36: #{decoder_forward_pallas.4} parent=27 // pred_fallthru
              _
          $region28: #{decoder_forward_pallas.4} parent=23 // pred_fallthru
            _
          %187 = vnop
        $region24: #{decoder_forward_pallas.4} parent=19 // pred_fallthru
          _
        // Predicated region
        $region59: #{decoder_forward_pallas.4} parent=19 // pred_check
          %p188 = pneg %p55
        $region60: #{decoder_forward_pallas.4} parent=19 // pred_check_branch
          %190 = sbr.rel (%p188) target = $region62
        $region61: #{decoder_forward_pallas.4} parent=19 // pred_region
          %s191 = sand.u32 %s45, 1
          %s192 = sand.u32 %s45, 1
          %s193 = smul.addr %s192, 16
          %s194 = scalar_lea.vmem [#allocation3], %s193
          %s195 = smul.u32 2, %s9
          %s196 = smul.addr %s195, 4
          %s197 = scalar_lea.vmem %s1, %s196
          // Predicated region
          $region63: #{decoder_forward_pallas.4} parent=61 // pred_check
            _
          $region64: #{decoder_forward_pallas.4} parent=61 // pred_check_branch
            %199 = sbr.rel (0) target = $region66
          $region65: #{decoder_forward_pallas.4} parent=61 // pred_region
            // Predicated region
            $region67: #{decoder_forward_pallas.4} parent=65 // pred_check
              _
            $region68: #{decoder_forward_pallas.4} parent=65 // pred_check_branch
              %201 = sbr.rel (0) target = $region70
            $region69: #{decoder_forward_pallas.4} parent=65 // pred_region
              // Predicated region
              $region82: #{decoder_forward_pallas.4} parent=69 // pred_check
                _
              $region83: #{decoder_forward_pallas.4} parent=69 // pred_check_branch
                %218 = sbr.rel (0) target = $region85
              $region84: #{decoder_forward_pallas.4} parent=69 // pred_region
                loop: start=0, step=1, limit=1
                $region86: #{decoder_forward_pallas.4} parent=84 // loop_pre_header
                  _
                $region87: #{decoder_forward_pallas.4} parent=84 // loop_header
                  %s220 = sphi 0, %s224
                  %p221 = scmp.ge.s32.totalorder %s220, 1
                  %s225 = sphi %s197, %s197
                  %s226 = sphi %s194, %s194
                $region88: #{decoder_forward_pallas.4} parent=84 // loop_header_branch
                  %223 = sbr.rel (%p221) target = $region92
                $region89: #{decoder_forward_pallas.4} parent=84 // loop_body
                  %v227 = vld [vmem:[%s225] sm:$0xff]
                  %228 = vst [vmem:[%s226] sm:$0xff] %v227
                  %v229 = vld [vmem:[%s225 + $0x10] sm:$0xff]
                  %230 = vst [vmem:[%s226 + $0x8] sm:$0xff] %v229
                $region90: #{decoder_forward_pallas.4} parent=84 // loop_footer
                  %s224 = sadd.s32 1, %s220
                $region91: #{decoder_forward_pallas.4} parent=84 // loop_footer_branch
                  %219 = sbr.rel target = $region87
                $region92: #{decoder_forward_pallas.4} parent=84 // loop_exit
                  _
              $region85: #{decoder_forward_pallas.4} parent=69 // pred_fallthru
                _
              // Predicated region
              $region93: #{decoder_forward_pallas.4} parent=69 // pred_check
                _
              $region94: #{decoder_forward_pallas.4} parent=69 // pred_check_branch
                %232 = sbr.rel target = $region96
              $region95: #{decoder_forward_pallas.4} parent=69 // pred_region
                _
              $region96: #{decoder_forward_pallas.4} parent=69 // pred_fallthru
                _
            $region70: #{decoder_forward_pallas.4} parent=65 // pred_fallthru
              _
            // Predicated region
            $region71: #{decoder_forward_pallas.4} parent=65 // pred_check
              _
            $region72: #{decoder_forward_pallas.4} parent=65 // pred_check_branch
              %203 = sbr.rel target = $region74
            $region73: #{decoder_forward_pallas.4} parent=65 // pred_region
              loop: start=0, step=1, limit=1
              $region75: #{decoder_forward_pallas.4} parent=73 // loop_pre_header
                _
              $region76: #{decoder_forward_pallas.4} parent=73 // loop_header
                %s206 = sphi 0, %s210
                %p207 = scmp.ge.s32.totalorder %s206, 1
                %s211 = sphi %s197, %s197
                %s212 = sphi %s194, %s194
              $region77: #{decoder_forward_pallas.4} parent=73 // loop_header_branch
                %209 = sbr.rel (%p207) target = $region81
              $region78: #{decoder_forward_pallas.4} parent=73 // loop_body
                %v213 = vld [vmem:[%s211] sm:$0xff]
                %214 = vst [vmem:[%s212] sm:$0xff] %v213
                %v215 = vld [vmem:[%s211 + $0x10] sm:$0xff]
                %216 = vst [vmem:[%s212 + $0x8] sm:$0xff] %v215
              $region79: #{decoder_forward_pallas.4} parent=73 // loop_footer
                %s210 = sadd.s32 1, %s206
              $region80: #{decoder_forward_pallas.4} parent=73 // loop_footer_branch
                %205 = sbr.rel target = $region76
              $region81: #{decoder_forward_pallas.4} parent=73 // loop_exit
                _
            $region74: #{decoder_forward_pallas.4} parent=65 // pred_fallthru
              _
          $region66: #{decoder_forward_pallas.4} parent=61 // pred_fallthru
            _
          %233 = vnop
        $region62: #{decoder_forward_pallas.4} parent=19 // pred_fallthru
          _
      $region20: #{decoder_forward_pallas.4} parent=5 // pred_fallthru
        _
      %p234 = scmp.le.s32.totalorder 1, %s9
      %p235 = scmp.lt.s32.totalorder %s9, 3
      %p236 = pnand %p234, %p235
      %p237 = pneg %p236
      // Predicated region
      $region97: #{decoder_forward_pallas.4} parent=5 // pred_check
        _
      $region98: #{decoder_forward_pallas.4} parent=5 // pred_check_branch
        %239 = sbr.rel (%p236) target = $region100
      $region99: #{decoder_forward_pallas.4} parent=5 // pred_region
        %s240 = ssub.s32 %s9, 1
        %s241 = sand.u32 %s22, 1
        %s242 = sand.u32 %s22, 1
        %s243 = smul.addr %s242, 40
        %s244 = scalar_lea.vmem [#allocation2], %s243
        // Predicated region
        $region101: #{decoder_forward_pallas.4} parent=99 // pred_check
          %p245 = pneg %p35
        $region102: #{decoder_forward_pallas.4} parent=99 // pred_check_branch
          %247 = sbr.rel (%p245) target = $region104
        $region103: #{decoder_forward_pallas.4} parent=99 // pred_region
          _
        $region104: #{decoder_forward_pallas.4} parent=99 // pred_fallthru
          _
        %s248 = sand.u32 %s48, 1
        %s249 = sand.u32 %s48, 1
        %s250 = smul.addr %s249, 16
        %s251 = scalar_lea.vmem [#allocation3], %s250
        // Predicated region
        $region105: #{decoder_forward_pallas.4} parent=99 // pred_check
          %p252 = pneg %p61
        $region106: #{decoder_forward_pallas.4} parent=99 // pred_check_branch
          %254 = sbr.rel (%p252) target = $region108
        $region107: #{decoder_forward_pallas.4} parent=99 // pred_region
          _
        $region108: #{decoder_forward_pallas.4} parent=99 // pred_fallthru
          _
        %s255 = sand.u32 %s22, 1
        %s256 = sand.u32 %s22, 1
        %s257 = smul.addr %s256, 40
        %s258 = scalar_lea.vmem [#allocation2], %s257
        %p259 = pneg %p35
        %p260 = pneg %p32
        %s261 = sand.u32 %s48, 1
        %s262 = sand.u32 %s48, 1
        %s263 = smul.addr %s262, 16
        %s264 = scalar_lea.vmem [#allocation3], %s263
        %p265 = pneg %p61
        %p266 = pneg %p58
        %p267 = pneg %p82
        %p268 = pneg %p79
        %p269 = pneg %p108
        %p270 = pneg %p105
        %s271 = sand.u32 %s95, 1
        %s272 = sand.u32 %s95, 1
        %s273 = smul.addr %s272, 16
        %s274 = scalar_lea.vmem [#allocation4], %s273
        %s275 = smul.u32 2, %s14
        %s276 = smul.u32 2, %s14
        %s277 = smul.u32 2, %s14
        %v278 = vld [vmem:[%s2] sm:$0xff]
        %v279 = vld [vmem:[%s2 + $0x8] sm:$0xff]
        %v280 = vld [vmem:[%s244] sm:$0xff]
        %v281 = vld [vmem:[%s244 + $0x8] sm:$0xff]
        %v282 = vld [vmem:[%s244 + $0x10] sm:$0xff]
        %v283 = vld [vmem:[%s244 + $0x18] sm:$0xff]
        %v284 = vld [vmem:[%s244 + $0x20] sm:$0x11]
        %v285 = vunpack.c.l.bf16 %v280
        %v286 = vunpack.c.h.bf16 %v280
        %v287 = vunpack.c.l.bf16 %v281
        %v288 = vunpack.c.h.bf16 %v281
        %v289 = vunpack.c.l.bf16 %v282
        %v290 = vunpack.c.h.bf16 %v282
        %v291 = vunpack.c.l.bf16 %v283
        %v292 = vunpack.c.h.bf16 %v283
        %v293 = vunpack.c.l.bf16 %v284
        %v294 = vunpack.c.h.bf16 %v284
        %vm295 = vcmask 269312
        %v297 = vsel %vm295, %v278, 0
        %v300 = vsel %vm295, %v279, 0
        %vm302 = vcmask 1040384
        %v304 = vsel %vm302, %v293, 0
        %v307 = vsel %vm302, %v294, 0
        %309 = vmatprep.subr.mxu0 %v286
        %310 = vmatpush1.msra.mxu0 %v285
        %311 = vmatprep.subr.mxu0 %v288
        %312 = vmatpush1.msra.mxu0 %v287
        %313 = vmatprep.subr.mxu0 %v290
        %314 = vmatpush1.msra.mxu0 %v289
        %315 = vmatprep.subr.mxu0 %v292
        %316 = vmatpush1.msra.mxu0 %v291
        %317 = vmatprep.subr.mxu0 %v307
        %318 = vmatpush1.msra.mxu0 %v304
        %319 = vmatprep.subr.mxu0 0.0
        %320 = vmatpush1.msra.mxu0 0.0
        %321 = vmatprep.subr.mxu0 0.0
        %322 = vmatpush1.msra.mxu0 0.0
        %323 = vmatprep.subr.mxu0 0.0
        %324 = vmatpush1.msra.mxu0 0.0
        %325 = vmatprep.subr.mxu0 0.0
        %326 = vmatpush1.msra.mxu0 0.0
        %327 = vmatprep.subr.mxu0 0.0
        %328 = vmatpush1.msra.mxu0 0.0
        %329 = vmatprep.subr.mxu0 0.0
        %330 = vmatpush1.msra.mxu0 0.0
        %331 = vmatprep.subr.mxu0 0.0
        %332 = vmatpush1.msra.mxu0 0.0
        %333 = vmatprep.subr.mxu0 0.0
        %334 = vmatpush1.msra.mxu0 0.0
        %335 = vmatprep.subr.mxu0 0.0
        %336 = vmatpush1.msra.mxu0 0.0
        %337 = vmatprep.subr.mxu0 0.0
        %338 = vmatpush1.msra.mxu0 0.0
        %339 = vmatprep.subr.mxu0 0.0
        %340 = vmatpush1.msra.mxu0 0.0
        %341 = vmatprep.subr.mxu0 0.0
        %342 = vmatpush1.msra.mxu0 0.0
        %343 = vmatprep.subr.mxu0 0.0
        %344 = vmatpush1.msra.mxu0 0.0
        %345 = vmatprep.subr.mxu0 0.0
        %346 = vmatpush1.msra.mxu0 0.0
        %347 = vmatprep.subr.mxu0 0.0
        %348 = vmatpush1.msra.mxu0 0.0
        %349 = vmatprep.subr.mxu0 0.0
        %350 = vmatpush1.msra.mxu0 0.0
        %351 = vmatprep.subr.mxu0 0.0
        %352 = vmatpush1.msra.mxu0 0.0
        %353 = vmatprep.subr.mxu0 0.0
        %354 = vmatpush1.msra.mxu0 0.0
        %355 = vmatprep.subr.mxu0 0.0
        %356 = vmatpush1.msra.mxu0 0.0
        %357 = vmatprep.subr.mxu0 0.0
        %358 = vmatpush1.msra.mxu0 0.0
        %359 = vmatprep.subr.mxu0 0.0
        %360 = vmatpush1.msra.mxu0 0.0
        %361 = vmatprep.subr.mxu0 0.0
        %362 = vmatpush1.msra.mxu0 0.0
        %363 = vmatprep.subr.mxu0 0.0
        %364 = vmatpush1.msra.mxu0 0.0
        %365 = vmatprep.subr.mxu0 0.0
        %366 = vmatpush1.msra.mxu0 0.0
        %367 = vmatprep.subr.mxu0 0.0
        %368 = vmatpush1.msra.mxu0 0.0
        %369 = vmatprep.subr.mxu0 0.0
        %370 = vmatpush1.msra.mxu0 0.0
        %371 = vmatprep.subr.mxu0 0.0
        %372 = vmatpush1.msra.mxu0 0.0
        %373 = vmatprep.mubr.f32.mxu0 0.0
        %374 = vmatmul.mubr.f32.gmra.mrb[0].mxu0 %v297
        %v375 = vpop.f32.mrb[0].mxu0
        %v376 = vadd.f32 0.0, %v375
        %v377 = vpop.f32.mrb[0].mxu0
        %v378 = vadd.f32 0.0, %v377
        %379 = vmatprep.mubr.f32.mxu0 0.0
        %380 = vmatmul.mubr.f32.gmra.mrb[0].mxu0 %v300
        %v381 = vpop.f32.mrb[0].mxu0
        %v382 = vadd.f32 0.0, %v381
        %v383 = vpop.f32.mrb[0].mxu0
        %v384 = vadd.f32 0.0, %v383
        %385 = vdwg.mxu0
        %vm386 = vcmp.ge.f32.partialorder %v376, 0.0
        %vm387 = vcmp.ge.f32.partialorder %v378, 0.0
        %vm388 = vcmp.ge.f32.partialorder %v382, 0.0
        %vm389 = vcmp.ge.f32.partialorder %v384, 0.0
        %v390 = vmul.f32 %v376, 0.01
        %v391 = vmul.f32 %v378, 0.01
        %v392 = vmul.f32 %v382, 0.01
        %v393 = vmul.f32 %v384, 0.01
        %v394 = vsel %vm386, %v376, %v390
        %v395 = vsel %vm387, %v378, %v391
        %v396 = vsel %vm388, %v382, %v392
        %v397 = vsel %vm389, %v384, %v393
        %v398 = vld [vmem:[%s251] sm:$0xff]
        %v399 = vld [vmem:[%s251 + $0x8] sm:$0xff]
        %v400 = vunpack.c.l.bf16 %v398
        %v401 = vunpack.c.h.bf16 %v398
        %v402 = vunpack.c.l.bf16 %v399
        %v403 = vunpack.c.h.bf16 %v399
        %v404 = vadd.f32 %v394, %v400
        %v405 = vadd.f32 %v395, %v401
        %v406 = vadd.f32 %v396, %v402
        %v407 = vadd.f32 %v397, %v403
        %v408 = vmul.f32 %v404, 0.5
        %v409 = vmul.f32 %v405, 0.5
        %v410 = vmul.f32 %v406, 0.5
        %v411 = vmul.f32 %v407, 0.5
        %v412 = vpack.c.bf16 %v410, %v408
        %v413 = vpack.c.bf16 %v411, %v409
        %v416 = vunpack.c.l.b16 %v412
        %v417 = vunpack.c.l.b16 %v413
        %v418 = vunpack.c.h.b16 %v412
        %v419 = vunpack.c.h.b16 %v413
        %v420 = vpack.c.b16 %v417, %v416
        %v421 = vpack.c.b16 %v419, %v418
        %424 = vst [vmem:[%s274] sm:$0xff] %v420
        %425 = vst [vmem:[%s274 + $0x8] sm:$0xff] %v421
        %s426 = sand.u32 %s95, 1
        %s427 = sand.u32 %s95, 1
        %s428 = smul.addr %s427, 16
        %s429 = scalar_lea.vmem [#allocation4], %s428
        // Predicated region
        $region109: #{decoder_forward_pallas.4} parent=99 // pred_check
          %p430 = pneg %p105
        $region110: #{decoder_forward_pallas.4} parent=99 // pred_check_branch
          %432 = sbr.rel (%p430) target = $region112
        $region111: #{decoder_forward_pallas.4} parent=99 // pred_region
          %s433 = smul.u32 2, %s14
          %s434 = smul.addr %s433, 4
          %s435 = scalar_lea.vmem %s3, %s434
          // Predicated region
          $region113: #{decoder_forward_pallas.4} parent=111 // pred_check
            _
          $region114: #{decoder_forward_pallas.4} parent=111 // pred_check_branch
            %437 = sbr.rel (0) target = $region116
          $region115: #{decoder_forward_pallas.4} parent=111 // pred_region
            // Predicated region
            $region117: #{decoder_forward_pallas.4} parent=115 // pred_check
              _
            $region118: #{decoder_forward_pallas.4} parent=115 // pred_check_branch
              %439 = sbr.rel (0) target = $region120
            $region119: #{decoder_forward_pallas.4} parent=115 // pred_region
              // Predicated region
              $region132: #{decoder_forward_pallas.4} parent=119 // pred_check
                _
              $region133: #{decoder_forward_pallas.4} parent=119 // pred_check_branch
                %456 = sbr.rel (0) target = $region135
              $region134: #{decoder_forward_pallas.4} parent=119 // pred_region
                loop: start=0, step=1, limit=1
                $region136: #{decoder_forward_pallas.4} parent=134 // loop_pre_header
                  _
                $region137: #{decoder_forward_pallas.4} parent=134 // loop_header
                  %s458 = sphi 0, %s462
                  %p459 = scmp.ge.s32.totalorder %s458, 1
                  %s463 = sphi %s429, %s429
                  %s464 = sphi %s435, %s435
                $region138: #{decoder_forward_pallas.4} parent=134 // loop_header_branch
                  %461 = sbr.rel (%p459) target = $region142
                $region139: #{decoder_forward_pallas.4} parent=134 // loop_body
                  %v465 = vld [vmem:[%s463] sm:$0xff]
                  %466 = vst [vmem:[%s464] sm:$0xff] %v465
                  %v467 = vld [vmem:[%s463 + $0x8] sm:$0xff]
                  %468 = vst [vmem:[%s464 + $0x10] sm:$0xff] %v467
                $region140: #{decoder_forward_pallas.4} parent=134 // loop_footer
                  %s462 = sadd.s32 1, %s458
                $region141: #{decoder_forward_pallas.4} parent=134 // loop_footer_branch
                  %457 = sbr.rel target = $region137
                $region142: #{decoder_forward_pallas.4} parent=134 // loop_exit
                  _
              $region135: #{decoder_forward_pallas.4} parent=119 // pred_fallthru
                _
              // Predicated region
              $region143: #{decoder_forward_pallas.4} parent=119 // pred_check
                _
              $region144: #{decoder_forward_pallas.4} parent=119 // pred_check_branch
                %470 = sbr.rel target = $region146
              $region145: #{decoder_forward_pallas.4} parent=119 // pred_region
                _
              $region146: #{decoder_forward_pallas.4} parent=119 // pred_fallthru
                _
            $region120: #{decoder_forward_pallas.4} parent=115 // pred_fallthru
              _
            // Predicated region
            $region121: #{decoder_forward_pallas.4} parent=115 // pred_check
              _
            $region122: #{decoder_forward_pallas.4} parent=115 // pred_check_branch
              %441 = sbr.rel target = $region124
            $region123: #{decoder_forward_pallas.4} parent=115 // pred_region
              loop: start=0, step=1, limit=1
              $region125: #{decoder_forward_pallas.4} parent=123 // loop_pre_header
                _
              $region126: #{decoder_forward_pallas.4} parent=123 // loop_header
                %s444 = sphi 0, %s448
                %p445 = scmp.ge.s32.totalorder %s444, 1
                %s449 = sphi %s429, %s429
                %s450 = sphi %s435, %s435
              $region127: #{decoder_forward_pallas.4} parent=123 // loop_header_branch
                %447 = sbr.rel (%p445) target = $region131
              $region128: #{decoder_forward_pallas.4} parent=123 // loop_body
                %v451 = vld [vmem:[%s449] sm:$0xff]
                %452 = vst [vmem:[%s450] sm:$0xff] %v451
                %v453 = vld [vmem:[%s449 + $0x8] sm:$0xff]
                %454 = vst [vmem:[%s450 + $0x10] sm:$0xff] %v453
              $region129: #{decoder_forward_pallas.4} parent=123 // loop_footer
                %s448 = sadd.s32 1, %s444
              $region130: #{decoder_forward_pallas.4} parent=123 // loop_footer_branch
                %443 = sbr.rel target = $region126
              $region131: #{decoder_forward_pallas.4} parent=123 // loop_exit
                _
            $region124: #{decoder_forward_pallas.4} parent=115 // pred_fallthru
              _
          $region116: #{decoder_forward_pallas.4} parent=111 // pred_fallthru
            _
          %471 = vnop
        $region112: #{decoder_forward_pallas.4} parent=99 // pred_fallthru
          _
      $region100: #{decoder_forward_pallas.4} parent=5 // pred_fallthru
        _
      %p472 = scmp.le.s32.totalorder 2, %s9
      // Predicated region
      $region147: #{decoder_forward_pallas.4} parent=5 // pred_check
        %p473 = pneg %p472
      $region148: #{decoder_forward_pallas.4} parent=5 // pred_check_branch
        %475 = sbr.rel (%p473) target = $region150
      $region149: #{decoder_forward_pallas.4} parent=5 // pred_region
        %s476 = ssub.s32 %s9, 2
        // Predicated region
        $region151: #{decoder_forward_pallas.4} parent=149 // pred_check
          %p477 = pneg %p111
        $region152: #{decoder_forward_pallas.4} parent=149 // pred_check_branch
          %479 = sbr.rel (%p477) target = $region154
        $region153: #{decoder_forward_pallas.4} parent=149 // pred_region
          %s480 = sand.u32 %s96, 1
          %s481 = sand.u32 %s96, 1
          %s482 = smul.addr %s481, 16
          %s483 = scalar_lea.vmem [#allocation4], %s482
        $region154: #{decoder_forward_pallas.4} parent=149 // pred_fallthru
          _
      $region150: #{decoder_forward_pallas.4} parent=5 // pred_fallthru
        _
    $region6: #{decoder_forward_pallas.4} parent=1 // loop_footer
      %s13 = sadd.s32 1, %s9
    $region7: #{decoder_forward_pallas.4} parent=1 // loop_footer_branch
      %8 = sbr.rel target = $region3
    $region8: #{decoder_forward_pallas.4} parent=1 // loop_exit
      _

// kernel: decoder_forward_pallas.5
$region0: #{decoder_forward_pallas.5}
  #allocation0 [shape = 'u32[]', space=smem, size = 0x4, offset = 0x4, fixed_abs, tag = 'smem constant byte address 0x4 - core index']
  #allocation1 [shape = 'u32[144,128]{1,0:T(1,128)}', space=vmem, size = 0x12000, scoped, tag = 'internal scratch']
  %s0 = inlined_call_operand.vmem [shape: bf16[4,1280], index: 0, kind: input, shape index: {}]
  %s1 = inlined_call_operand.vmem [shape: f32[2,4], index: 1, kind: input, shape index: {}]
  %s2 = inlined_call_operand.vmem [shape: f32[2,1], index: 2, kind: input, shape index: {}]
  %s3 = inlined_call_operand.vmem [shape: f32[2,1280], index: 3, kind: output, shape index: {}]
  %s4 = sld [smem:[#allocation0]]
  $region45: #{decoder_forward_pallas.5} parent=0
    _
  %s6 = ssub.s32 1, %s4
  %s7 = scalar_select 0, %s6, %s4
  loop: start=0, step=1, limit=4
  $region2: #{decoder_forward_pallas.5} parent=0 // loop_pre_header
    _
  $region3: #{decoder_forward_pallas.5} parent=0 // loop_header
    %s9 = sphi 0, %s13
    %p10 = scmp.ge.s32.totalorder %s9, 4
    %s19 = sphi 0, %s21
    %s22 = sphi 0, %s19
    %s23 = sphi 0, %s22
    %s39 = sphi 0, %s23
    %s43 = sphi 0, %s43
    %s45 = sphi 0, %s43
    %s46 = sphi 0, %s45
    %s60 = sphi 0, %s46
    %s64 = sphi 0, %s64
    %s66 = sphi 0, %s64
    %s67 = sphi 0, %s66
    %s81 = sphi 0, %s67
    %s87 = sphi 0, %s89
    %s90 = sphi 0, %s87
    %s91 = sphi 0, %s90
    %s107 = sphi 0, %s91
  $region4: #{decoder_forward_pallas.5} parent=0 // loop_header_branch
    %12 = sbr.rel (%p10) target = $region8
  $region5: #{decoder_forward_pallas.5} parent=0 // loop_body
    %s14 = ssub.s32 %s9, 1
    %s15 = ssub.s32 %s9, 2
    %s16 = sadd.s32 %s9, 1
    %s17 = ssub.s32 %s9, %s16
    %p18 = scmp.eq.s32.totalorder %s17, 0
    %s20 = sadd.s32 %s19, 1
    %s21 = scalar_select %p18, %s19, %s20
    %p24 = pneg %p18
    %p25 = scmp.eq.s32.totalorder %s9, 1
    %p26 = por %p24, %p25
    %p27 = scmp.ne.s32.totalorder %s19, %s22
    %p28 = scmp.eq.s32.totalorder %s9, 0
    %p29 = por %p27, %p28
    %p30 = scmp.ne.s32.totalorder %s19, %s22
    %p31 = scmp.eq.s32.totalorder %s14, 1
    %p32 = por %p30, %p31
    %p33 = scmp.ne.s32.totalorder %s22, %s23
    %p34 = scmp.eq.s32.totalorder %s14, 0
    %p35 = por %p33, %p34
    %p36 = scmp.ne.s32.totalorder %s22, %s23
    %p37 = scmp.eq.s32.totalorder %s15, 1
    %p38 = por %p36, %p37
    %p40 = scmp.ne.s32.totalorder %s23, %s39
    %p41 = scmp.eq.s32.totalorder %s15, 0
    %p42 = por %p40, %p41
    %s44 = sadd.s32 %s43, 1
    %p47 = scmp.eq.s32.totalorder %s9, 1
    %p48 = scmp.ne.s32.totalorder %s43, %s45
    %p49 = scmp.eq.s32.totalorder %s9, 0
    %p50 = por %p48, %p49
    %p51 = scmp.ne.s32.totalorder %s43, %s45
    %p52 = scmp.eq.s32.totalorder %s14, 1
    %p53 = por %p51, %p52
    %p54 = scmp.ne.s32.totalorder %s45, %s46
    %p55 = scmp.eq.s32.totalorder %s14, 0
    %p56 = por %p54, %p55
    %p57 = scmp.ne.s32.totalorder %s45, %s46
    %p58 = scmp.eq.s32.totalorder %s15, 1
    %p59 = por %p57, %p58
    %p61 = scmp.ne.s32.totalorder %s46, %s60
    %p62 = scmp.eq.s32.totalorder %s15, 0
    %p63 = por %p61, %p62
    %s65 = sadd.s32 %s64, 1
    %p68 = scmp.eq.s32.totalorder %s9, 1
    %p69 = scmp.ne.s32.totalorder %s64, %s66
    %p70 = scmp.eq.s32.totalorder %s9, 0
    %p71 = por %p69, %p70
    %p72 = scmp.ne.s32.totalorder %s64, %s66
    %p73 = scmp.eq.s32.totalorder %s14, 1
    %p74 = por %p72, %p73
    %p75 = scmp.ne.s32.totalorder %s66, %s67
    %p76 = scmp.eq.s32.totalorder %s14, 0
    %p77 = por %p75, %p76
    %p78 = scmp.ne.s32.totalorder %s66, %s67
    %p79 = scmp.eq.s32.totalorder %s15, 1
    %p80 = por %p78, %p79
    %p82 = scmp.ne.s32.totalorder %s67, %s81
    %p83 = scmp.eq.s32.totalorder %s15, 0
    %p84 = por %p82, %p83
    %s85 = ssub.s32 %s9, %s16
    %p86 = scmp.eq.s32.totalorder %s85, 0
    %s88 = sadd.s32 %s87, 1
    %s89 = scalar_select %p86, %s87, %s88
    %p92 = pneg %p86
    %p93 = scmp.eq.s32.totalorder %s9, 1
    %p94 = por %p92, %p93
    %p95 = scmp.ne.s32.totalorder %s87, %s90
    %p96 = scmp.eq.s32.totalorder %s9, 0
    %p97 = por %p95, %p96
    %p98 = scmp.ne.s32.totalorder %s87, %s90
    %p99 = scmp.eq.s32.totalorder %s14, 1
    %p100 = por %p98, %p99
    %p101 = scmp.ne.s32.totalorder %s90, %s91
    %p102 = scmp.eq.s32.totalorder %s14, 0
    %p103 = por %p101, %p102
    %p104 = scmp.ne.s32.totalorder %s90, %s91
    %p105 = scmp.eq.s32.totalorder %s15, 1
    %p106 = por %p104, %p105
    %p108 = scmp.ne.s32.totalorder %s91, %s107
    %p109 = scmp.eq.s32.totalorder %s15, 0
    %p110 = por %p108, %p109
    %p111 = scmp.le.s32.totalorder 1, %s9
    %p112 = scmp.lt.s32.totalorder %s9, 3
    %p113 = pnand %p111, %p112
    %p114 = pneg %p113
    // Predicated region
    $region9: #{decoder_forward_pallas.5} parent=5 // pred_check
      _
    $region10: #{decoder_forward_pallas.5} parent=5 // pred_check_branch
      %116 = sbr.rel (%p113) target = $region12
    $region11: #{decoder_forward_pallas.5} parent=5 // pred_region
      %s117 = ssub.s32 %s9, 1
      // Predicated region
      $region13: #{decoder_forward_pallas.5} parent=11 // pred_check
        %p118 = pneg %p56
      $region14: #{decoder_forward_pallas.5} parent=11 // pred_check_branch
        %120 = sbr.rel (%p118) target = $region16
      $region15: #{decoder_forward_pallas.5} parent=11 // pred_region
        _
      $region16: #{decoder_forward_pallas.5} parent=11 // pred_fallthru
        _
      // Predicated region
      $region17: #{decoder_forward_pallas.5} parent=11 // pred_check
        %p121 = pneg %p77
      $region18: #{decoder_forward_pallas.5} parent=11 // pred_check_branch
        %123 = sbr.rel (%p121) target = $region20
      $region19: #{decoder_forward_pallas.5} parent=11 // pred_region
        _
      $region20: #{decoder_forward_pallas.5} parent=11 // pred_fallthru
        _
    $region12: #{decoder_forward_pallas.5} parent=5 // pred_fallthru
      _
    %p124 = scmp.lt.s32.totalorder %s9, 2
    // Predicated region
    $region21: #{decoder_forward_pallas.5} parent=5 // pred_check
      %p125 = pneg %p124
    $region22: #{decoder_forward_pallas.5} parent=5 // pred_check_branch
      %127 = sbr.rel (%p125) target = $region24
    $region23: #{decoder_forward_pallas.5} parent=5 // pred_region
      // Predicated region
      $region25: #{decoder_forward_pallas.5} parent=23 // pred_check
        %p128 = pneg %p29
      $region26: #{decoder_forward_pallas.5} parent=23 // pred_check_branch
        %130 = sbr.rel (%p128) target = $region28
      $region27: #{decoder_forward_pallas.5} parent=23 // pred_region
        %s131 = smul.u32 5, %s9
        %p132 = scmp.lt.s32.totalorder %s131, 9
        %s133 = scalar_select %p132, %s131, 9
        %s134 = smul.addr %s133, 2
        %s135 = scalar_lea.vmem %s0, %s134
        %s136 = smul.u32 5, %s9
      $region28: #{decoder_forward_pallas.5} parent=23 // pred_fallthru
        _
    $region24: #{decoder_forward_pallas.5} parent=5 // pred_fallthru
      _
    %p137 = scmp.le.s32.totalorder 1, %s9
    %p138 = scmp.lt.s32.totalorder %s9, 3
    %p139 = pnand %p137, %p138
    %p140 = pneg %p139
    // Predicated region
    $region29: #{decoder_forward_pallas.5} parent=5 // pred_check
      _
    $region30: #{decoder_forward_pallas.5} parent=5 // pred_check_branch
      %142 = sbr.rel (%p139) target = $region32
    $region31: #{decoder_forward_pallas.5} parent=5 // pred_region
      %s143 = ssub.s32 %s9, 1
      %s144 = smul.u32 5, %s14
      %p145 = scmp.lt.s32.totalorder %s144, 9
      %s146 = scalar_select %p145, %s144, 9
      %s147 = smul.addr %s146, 2
      %s148 = scalar_lea.vmem %s0, %s147
      %p149 = pneg %p35
      %p150 = pneg %p32
      %p151 = pneg %p56
      %p152 = pneg %p53
      %p153 = pneg %p77
      %p154 = pneg %p74
      %p155 = pneg %p103
      %p156 = pneg %p100
      %s157 = smul.u32 5, %s14
      %p158 = scmp.lt.s32.totalorder %s157, 9
      %s159 = scalar_select %p158, %s157, 9
      %s160 = smul.addr %s159, 2
      %s161 = scalar_lea.vmem %s3, %s160
      %s162 = smul.u32 5, %s14
      %p163 = scmp.lt.s32.totalorder %s162, 9
      %s164 = scalar_select %p163, %s162, 9
      %s165 = smul.addr %s164, 2
      %s166 = scalar_lea.vmem %s0, %s165
      %s167 = smul.u32 5, %s14
      %s168 = smul.u32 5, %s14
      %p169 = scmp.lt.s32.totalorder %s168, 9
      %s170 = scalar_select %p169, %s168, 9
      %s171 = smul.addr %s170, 2
      %s172 = scalar_lea.vmem %s3, %s171
      %s173 = smul.u32 5, %s14
      %v174 = vld [vmem:[%s1] sm:$0x3]
      %v175 = vld [vmem:[%s166] sm:$0xff]
      %v176 = vld [vmem:[%s166 + $0x8] sm:$0x3]
      %v177 = vunpack.c.l.bf16 %v175
      %v178 = vunpack.c.h.bf16 %v175
      %v179 = vunpack.c.l.bf16 %v176
      %v180 = vld [vmem:[%s2] sm:$0x3]
      %182 = vset.pattern.permute.xlu0 0
      %183 = vperm.xlu0 %182, %v180
      %v184 = vpop.permute.xlu0 %183
      %v189 = vcombine.high %v177, %v177
      %v190 = vcombine.high %v178, %v178
      %vm191 = vcmask 31744
      %v193 = vsel %vm191, %v174, 0
      %vm195 = vcmask 1043456
      %v196 = vsel %vm195, %v177, 0
      %v198 = vsel %vm195, %v189, 0
      %v200 = vsel %vm195, %v178, 0
      %v202 = vsel %vm195, %v190, 0
      %v204 = vsel %vm195, %v179, 0
      %206 = vmatprep.subr.mxu0 %v198
      %207 = vmatpush1.msra.mxu0 %v196
      %208 = vmatprep.subr.mxu0 0.0
      %209 = vmatpush1.msra.mxu0 0.0
      %210 = vmatprep.subr.mxu0 0.0
      %211 = vmatpush1.msra.mxu0 0.0
      %212 = vmatprep.subr.mxu0 0.0
      %213 = vmatpush1.msra.mxu0 0.0
      %214 = vmatprep.subr.mxu0 0.0
      %215 = vmatpush1.msra.mxu0 0.0
      %216 = vmatprep.subr.mxu0 0.0
      %217 = vmatpush1.msra.mxu0 0.0
      %218 = vmatprep.subr.mxu0 0.0
      %219 = vmatpush1.msra.mxu0 0.0
      %220 = vmatprep.subr.mxu0 0.0
      %221 = vmatpush1.msra.mxu0 0.0
      %222 = vmatprep.subr.mxu0 0.0
      %223 = vmatpush1.msra.mxu0 0.0
      %224 = vmatprep.subr.mxu0 0.0
      %225 = vmatpush1.msra.mxu0 0.0
      %226 = vmatprep.subr.mxu0 0.0
      %227 = vmatpush1.msra.mxu0 0.0
      %228 = vmatprep.subr.mxu0 0.0
      %229 = vmatpush1.msra.mxu0 0.0
      %230 = vmatprep.subr.mxu0 0.0
      %231 = vmatpush1.msra.mxu0 0.0
      %232 = vmatprep.subr.mxu0 0.0
      %233 = vmatpush1.msra.mxu0 0.0
      %234 = vmatprep.subr.mxu0 0.0
      %235 = vmatpush1.msra.mxu0 0.0
      %236 = vmatprep.subr.mxu0 0.0
      %237 = vmatpush1.msra.mxu0 0.0
      %238 = vmatprep.subr.mxu0 0.0
      %239 = vmatpush1.msra.mxu0 0.0
      %240 = vmatprep.subr.mxu0 0.0
      %241 = vmatpush1.msra.mxu0 0.0
      %242 = vmatprep.subr.mxu0 0.0
      %243 = vmatpush1.msra.mxu0 0.0
      %244 = vmatprep.subr.mxu0 0.0
      %245 = vmatpush1.msra.mxu0 0.0
      %246 = vmatprep.subr.mxu0 0.0
      %247 = vmatpush1.msra.mxu0 0.0
      %248 = vmatprep.subr.mxu0 0.0
      %249 = vmatpush1.msra.mxu0 0.0
      %250 = vmatprep.subr.mxu0 0.0
      %251 = vmatpush1.msra.mxu0 0.0
      %252 = vmatprep.subr.mxu0 0.0
      %253 = vmatpush1.msra.mxu0 0.0
      %254 = vmatprep.subr.mxu0 0.0
      %255 = vmatpush1.msra.mxu0 0.0
      %256 = vmatprep.subr.mxu0 0.0
      %257 = vmatpush1.msra.mxu0 0.0
      %258 = vmatprep.subr.mxu0 0.0
      %259 = vmatpush1.msra.mxu0 0.0
      %260 = vmatprep.subr.mxu0 0.0
      %261 = vmatpush1.msra.mxu0 0.0
      %262 = vmatprep.subr.mxu0 0.0
      %263 = vmatpush1.msra.mxu0 0.0
      %264 = vmatprep.subr.mxu0 0.0
      %265 = vmatpush1.msra.mxu0 0.0
      %266 = vmatprep.subr.mxu0 0.0
      %267 = vmatpush1.msra.mxu0 0.0
      %268 = vmatprep.subr.mxu0 0.0
      %269 = vmatpush1.msra.mxu0 0.0
      %270 = vmatprep.mubr.f32.mxu0 0.0
      %271 = vmatmul.mubr.f32.gmra.mrb[0].mxu0 %v193
      %v272 = vpop.f32.mrb[0].mxu0
      %v273 = vadd.f32 %v184, %v272
      %v274 = vpop.f32.mrb[0].mxu0
      %v275 = vadd.f32 %v184, %v274
      %276 = vdwg.mxu0
      %277 = vmatprep.subr.mxu0 %v202
      %278 = vmatpush1.msra.mxu0 %v200
      %279 = vmatprep.subr.mxu0 0.0
      %280 = vmatpush1.msra.mxu0 0.0
      %281 = vmatprep.subr.mxu0 0.0
      %282 = vmatpush1.msra.mxu0 0.0
      %283 = vmatprep.subr.mxu0 0.0
      %284 = vmatpush1.msra.mxu0 0.0
      %285 = vmatprep.subr.mxu0 0.0
      %286 = vmatpush1.msra.mxu0 0.0
      %287 = vmatprep.subr.mxu0 0.0
      %288 = vmatpush1.msra.mxu0 0.0
      %289 = vmatprep.subr.mxu0 0.0
      %290 = vmatpush1.msra.mxu0 0.0
      %291 = vmatprep.subr.mxu0 0.0
      %292 = vmatpush1.msra.mxu0 0.0
      %293 = vmatprep.subr.mxu0 0.0
      %294 = vmatpush1.msra.mxu0 0.0
      %295 = vmatprep.subr.mxu0 0.0
      %296 = vmatpush1.msra.mxu0 0.0
      %297 = vmatprep.subr.mxu0 0.0
      %298 = vmatpush1.msra.mxu0 0.0
      %299 = vmatprep.subr.mxu0 0.0
      %300 = vmatpush1.msra.mxu0 0.0
      %301 = vmatprep.subr.mxu0 0.0
      %302 = vmatpush1.msra.mxu0 0.0
      %303 = vmatprep.subr.mxu0 0.0
      %304 = vmatpush1.msra.mxu0 0.0
      %305 = vmatprep.subr.mxu0 0.0
      %306 = vmatpush1.msra.mxu0 0.0
      %307 = vmatprep.subr.mxu0 0.0
      %308 = vmatpush1.msra.mxu0 0.0
      %309 = vmatprep.subr.mxu0 0.0
      %310 = vmatpush1.msra.mxu0 0.0
      %311 = vmatprep.subr.mxu0 0.0
      %312 = vmatpush1.msra.mxu0 0.0
      %313 = vmatprep.subr.mxu0 0.0
      %314 = vmatpush1.msra.mxu0 0.0
      %315 = vmatprep.subr.mxu0 0.0
      %316 = vmatpush1.msra.mxu0 0.0
      %317 = vmatprep.subr.mxu0 0.0
      %318 = vmatpush1.msra.mxu0 0.0
      %319 = vmatprep.subr.mxu0 0.0
      %320 = vmatpush1.msra.mxu0 0.0
      %321 = vmatprep.subr.mxu0 0.0
      %322 = vmatpush1.msra.mxu0 0.0
      %323 = vmatprep.subr.mxu0 0.0
      %324 = vmatpush1.msra.mxu0 0.0
      %325 = vmatprep.subr.mxu0 0.0
      %326 = vmatpush1.msra.mxu0 0.0
      %327 = vmatprep.subr.mxu0 0.0
      %328 = vmatpush1.msra.mxu0 0.0
      %329 = vmatprep.subr.mxu0 0.0
      %330 = vmatpush1.msra.mxu0 0.0
      %331 = vmatprep.subr.mxu0 0.0
      %332 = vmatpush1.msra.mxu0 0.0
      %333 = vmatprep.subr.mxu0 0.0
      %334 = vmatpush1.msra.mxu0 0.0
      %335 = vmatprep.subr.mxu0 0.0
      %336 = vmatpush1.msra.mxu0 0.0
      %337 = vmatprep.subr.mxu0 0.0
      %338 = vmatpush1.msra.mxu0 0.0
      %339 = vmatprep.subr.mxu0 0.0
      %340 = vmatpush1.msra.mxu0 0.0
      %341 = vmatprep.mubr.f32.mxu0 0.0
      %342 = vmatmul.mubr.f32.gmra.mrb[0].mxu0 %v193
      %v343 = vpop.f32.mrb[0].mxu0
      %v344 = vadd.f32 %v184, %v343
      %v345 = vpop.f32.mrb[0].mxu0
      %v346 = vadd.f32 %v184, %v345
      %347 = vdwg.mxu0
      %348 = vmatprep.subr.mxu0 0.0
      %349 = vmatpush1.msra.mxu0 %v204
      %350 = vmatprep.subr.mxu0 0.0
      %351 = vmatpush1.msra.mxu0 0.0
      %352 = vmatprep.subr.mxu0 0.0
      %353 = vmatpush1.msra.mxu0 0.0
      %354 = vmatprep.subr.mxu0 0.0
      %355 = vmatpush1.msra.mxu0 0.0
      %356 = vmatprep.subr.mxu0 0.0
      %357 = vmatpush1.msra.mxu0 0.0
      %358 = vmatprep.subr.mxu0 0.0
      %359 = vmatpush1.msra.mxu0 0.0
      %360 = vmatprep.subr.mxu0 0.0
      %361 = vmatpush1.msra.mxu0 0.0
      %362 = vmatprep.subr.mxu0 0.0
      %363 = vmatpush1.msra.mxu0 0.0
      %364 = vmatprep.subr.mxu0 0.0
      %365 = vmatpush1.msra.mxu0 0.0
      %366 = vmatprep.subr.mxu0 0.0
      %367 = vmatpush1.msra.mxu0 0.0
      %368 = vmatprep.subr.mxu0 0.0
      %369 = vmatpush1.msra.mxu0 0.0
      %370 = vmatprep.subr.mxu0 0.0
      %371 = vmatpush1.msra.mxu0 0.0
      %372 = vmatprep.subr.mxu0 0.0
      %373 = vmatpush1.msra.mxu0 0.0
      %374 = vmatprep.subr.mxu0 0.0
      %375 = vmatpush1.msra.mxu0 0.0
      %376 = vmatprep.subr.mxu0 0.0
      %377 = vmatpush1.msra.mxu0 0.0
      %378 = vmatprep.subr.mxu0 0.0
      %379 = vmatpush1.msra.mxu0 0.0
      %380 = vmatprep.subr.mxu0 0.0
      %381 = vmatpush1.msra.mxu0 0.0
      %382 = vmatprep.subr.mxu0 0.0
      %383 = vmatpush1.msra.mxu0 0.0
      %384 = vmatprep.subr.mxu0 0.0
      %385 = vmatpush1.msra.mxu0 0.0
      %386 = vmatprep.subr.mxu0 0.0
      %387 = vmatpush1.msra.mxu0 0.0
      %388 = vmatprep.subr.mxu0 0.0
      %389 = vmatpush1.msra.mxu0 0.0
      %390 = vmatprep.subr.mxu0 0.0
      %391 = vmatpush1.msra.mxu0 0.0
      %392 = vmatprep.subr.mxu0 0.0
      %393 = vmatpush1.msra.mxu0 0.0
      %394 = vmatprep.subr.mxu0 0.0
      %395 = vmatpush1.msra.mxu0 0.0
      %396 = vmatprep.subr.mxu0 0.0
      %397 = vmatpush1.msra.mxu0 0.0
      %398 = vmatprep.subr.mxu0 0.0
      %399 = vmatpush1.msra.mxu0 0.0
      %400 = vmatprep.subr.mxu0 0.0
      %401 = vmatpush1.msra.mxu0 0.0
      %402 = vmatprep.subr.mxu0 0.0
      %403 = vmatpush1.msra.mxu0 0.0
      %404 = vmatprep.subr.mxu0 0.0
      %405 = vmatpush1.msra.mxu0 0.0
      %406 = vmatprep.subr.mxu0 0.0
      %407 = vmatpush1.msra.mxu0 0.0
      %408 = vmatprep.subr.mxu0 0.0
      %409 = vmatpush1.msra.mxu0 0.0
      %410 = vmatprep.subr.mxu0 0.0
      %411 = vmatpush1.msra.mxu0 0.0
      %412 = vmatprep.mubr.f32.mxu0 0.0
      %413 = vmatmul.mubr.f32.gmra.mrb[0].mxu0 %v193
      %v414 = vpop.f32.mrb[0].mxu0
      %v415 = vadd.f32 %v184, %v414
      %v416 = vpop.f32.mrb[0].mxu0
      %417 = vdwg.mxu0
      %v418 = vand.u32 2147483647, %v273
      %v419 = vand.u32 2147483647, %v275
      %v420 = vand.u32 2147483647, %v344
      %v421 = vand.u32 2147483647, %v346
      %v422 = vand.u32 2147483647, %v415
      %v423 = vsub.f32 0.0, %v418
      %v424 = vsub.f32 0.0, %v419
      %v425 = vsub.f32 0.0, %v420
      %v426 = vsub.f32 0.0, %v421
      %v427 = vsub.f32 0.0, %v422
      %v428 = vmul.f32 %v423, 1.442695
      %v429 = vpow.pop %v428
      %v430 = vmul.f32 %v424, 1.442695
      %v431 = vpow.pop %v430
      %v432 = vmul.f32 %v425, 1.442695
      %v433 = vpow.pop %v432
      %v434 = vmul.f32 %v426, 1.442695
      %v435 = vpow.pop %v434
      %v436 = vmul.f32 %v427, 1.442695
      %v437 = vpow.pop %v436
      %v438 = vadd.f32 %v429, 1.0
      %v439 = vadd.f32 %v431, 1.0
      %v440 = vadd.f32 %v433, 1.0
      %v441 = vadd.f32 %v435, 1.0
      %v442 = vadd.f32 %v437, 1.0
      %v443 = vrcp.pop %v438
      %v444 = vmul.f32 1.0, %v443
      %v445 = vrcp.pop %v439
      %v446 = vmul.f32 1.0, %v445
      %v447 = vrcp.pop %v440
      %v448 = vmul.f32 1.0, %v447
      %v449 = vrcp.pop %v441
      %v450 = vmul.f32 1.0, %v449
      %v451 = vrcp.pop %v442
      %v452 = vmul.f32 1.0, %v451
      %vm453 = vcmp.ge.f32.partialorder %v273, 0.0
      %vm454 = vcmp.ge.f32.partialorder %v275, 0.0
      %vm455 = vcmp.ge.f32.partialorder %v344, 0.0
      %vm456 = vcmp.ge.f32.partialorder %v346, 0.0
      %vm457 = vcmp.ge.f32.partialorder %v415, 0.0
      %v458 = vsub.f32 1.0, %v444
      %v459 = vsub.f32 1.0, %v446
      %v460 = vsub.f32 1.0, %v448
      %v461 = vsub.f32 1.0, %v450
      %v462 = vsub.f32 1.0, %v452
      %v463 = vsel %vm453, %v444, %v458
      %v464 = vsel %vm454, %v446, %v459
      %v465 = vsel %vm455, %v448, %v460
      %v466 = vsel %vm456, %v450, %v461
      %v467 = vsel %vm457, %v452, %v462
      %v473 = vcombine.low %v463, %v464
      %v474 = vcombine.low %v465, %v466
      %v476 = vunpack.c.l.s4 1983009808
      %v477 = vunpack.c.0.s8 %v476
      %v478 = vlaneseq
      %v479 = vshrl.u32 %v478, 7
      %v480 = vsub.s32 %v477, %v479
      %v481 = vrot.slane %v473, %v480
      %v483 = vunpack.c.l.s4 1983009808
      %v484 = vunpack.c.0.s8 %v483
      %v485 = vlaneseq
      %v486 = vshrl.u32 %v485, 7
      %v487 = vsub.s32 %v484, %v486
      %v488 = vrot.slane %v474, %v487
      %v489 = vcombine.low %v481, %v488
      %v491 = vunpack.c.l.s4 1983009808
      %v492 = vunpack.c.0.s8 %v491
      %v493 = vlaneseq
      %v494 = vshrl.u32 %v493, 7
      %v495 = vsub.s32 %v492, %v494
      %v496 = vrot.slane %v467, %v495
      %499 = vst [vmem:[%s172] sm:$0xff] %v489
      %500 = vst [vmem:[%s172 + $0x8] sm:$0x3] %v496
      %s501 = smul.u32 5, %s14
      %p502 = scmp.lt.s32.totalorder %s501, 9
      %s503 = scalar_select %p502, %s501, 9
      %s504 = smul.addr %s503, 2
      %s505 = scalar_lea.vmem %s3, %s504
      // Predicated region
      $region33: #{decoder_forward_pallas.5} parent=31 // pred_check
        %p506 = pneg %p100
      $region34: #{decoder_forward_pallas.5} parent=31 // pred_check_branch
        %508 = sbr.rel (%p506) target = $region36
      $region35: #{decoder_forward_pallas.5} parent=31 // pred_region
        %s509 = smul.u32 5, %s14
      $region36: #{decoder_forward_pallas.5} parent=31 // pred_fallthru
        _
    $region32: #{decoder_forward_pallas.5} parent=5 // pred_fallthru
      _
    %p510 = scmp.le.s32.totalorder 2, %s9
    // Predicated region
    $region37: #{decoder_forward_pallas.5} parent=5 // pred_check
      %p511 = pneg %p510
    $region38: #{decoder_forward_pallas.5} parent=5 // pred_check_branch
      %513 = sbr.rel (%p511) target = $region40
    $region39: #{decoder_forward_pallas.5} parent=5 // pred_region
      %s514 = ssub.s32 %s9, 2
      // Predicated region
      $region41: #{decoder_forward_pallas.5} parent=39 // pred_check
        %p515 = pneg %p106
      $region42: #{decoder_forward_pallas.5} parent=39 // pred_check_branch
        %517 = sbr.rel (%p515) target = $region44
      $region43: #{decoder_forward_pallas.5} parent=39 // pred_region
        %s518 = smul.u32 5, %s15
        %p519 = scmp.lt.s32.totalorder %s518, 9
        %s520 = scalar_select %p519, %s518, 9
        %s521 = smul.addr %s520, 2
        %s522 = scalar_lea.vmem %s3, %s521
      $region44: #{decoder_forward_pallas.5} parent=39 // pred_fallthru
        _
    $region40: #{decoder_forward_pallas.5} parent=5 // pred_fallthru
      _
  $region6: #{decoder_forward_pallas.5} parent=0 // loop_footer
    %s13 = sadd.s32 1, %s9
  $region7: #{decoder_forward_pallas.5} parent=0 // loop_footer_branch
    %8 = sbr.rel target = $region3
  $region8: #{decoder_forward_pallas.5} parent=0 // loop_exit
    _

</llo_original>
